<compile_context>
chip_gen: v7x
topology: tpu7x:2x2x1
jax: 0.10.0
libtpu: 0.0.40
codegen_flags: <defaults>
</compile_context>

<pallas_src>
import functools

import jax
import jax.numpy as jnp
from jax import lax
from jax.experimental import pallas as pl
from jax.experimental.pallas import tpu as pltpu


def _leaky(x, slope):
    return jnp.where(x > 0, x, slope * x)


def _round_up(v, m):
    return ((v + m - 1) // m) * m


@functools.lru_cache(maxsize=None)
def _make_resblock_call(NB, L, CP, K, dilations, leaky, io_dtype_name, mxu_dtype_name):
    """Builds one fused pallas_call running the whole ResBlock on (NB, L, CP) tiles."""
    S = len(dilations)
    io_dtype = jnp.dtype(io_dtype_name)
    mxu_dtype = jnp.dtype(mxu_dtype_name)
    io_bytes = io_dtype.itemsize
    mxu_bytes = mxu_dtype.itemsize

    pads1 = tuple((K * d - d) // 2 for d in dilations)   # "same" padding, dilated conv
    pad2 = (K - 1) // 2                                   # "same" padding, dilation-1 conv

    # Halo sizes so every tap slice stays in-bounds and reads zeros outside [0, L).
    left_need = max([pad2] + list(pads1) + [0])
    right_need = max([(K - 1) - pad2]
                     + [(K - 1) * d - p for d, p in zip(dilations, pads1)] + [0])
    SUB = 16 if mxu_bytes < 4 else 8          # packed-sublane alignment for the scratch
    PAD_L = _round_up(left_need, SUB)
    LP = _round_up(PAD_L + L + right_need, SUB)

    def kernel(x_ref, w1_ref, b1_ref, w2_ref, b2_ref, o_ref, xpad_ref, taps_ref):
        # Zero ONLY the halo rows; the interior [PAD_L, PAD_L+L) is rewritten
        # before every conv, so the zero halo survives all stages.  Done every
        # grid step (not @pl.when(program_id==0)) so it is also correct when
        # the "parallel" batch axis is sharded across megacore TensorCores.
        if PAD_L > 0:
            xpad_ref[0:PAD_L, :] = jnp.zeros((PAD_L, CP), mxu_dtype)
        if LP > PAD_L + L:
            xpad_ref[PAD_L + L:LP, :] = jnp.zeros((LP - PAD_L - L, CP), mxu_dtype)

        x = x_ref[0].astype(jnp.float32)                    # (L, CP) f32 residual path

        def conv_same(xt_f32, w, b, dil, pad):
            # xt_f32: (L, CP) f32 ; w: (K*CP, CP) bf16 ; b: (1, CP) f32
            # Single (L, CP) f32->bf16 cast; all halo traffic is bf16.
            xpad_ref[PAD_L:PAD_L + L, :] = xt_f32.astype(mxu_dtype)
            # Pack the K shifted views into the bf16 taps scratch with plain
            # CP-wide block stores (no lane-axis concatenate, no hidden
            # relayouts), then run ONE MXU matmul with f32 accumulation.
            for k in range(K):
                start = PAD_L - pad + k * dil               # static int
                taps_ref[:, k * CP:(k + 1) * CP] = xpad_ref[start:start + L, :]
            y = jnp.dot(taps_ref[...], w, preferred_element_type=jnp.float32)
            return y + b                                    # (L, CP) f32

        for s in range(S):                                  # static unroll over stages
            d = dilations[s]
            xt = _leaky(x, leaky)
            xt = conv_same(xt, w1_ref[s], b1_ref[s], d, pads1[s])
            xt = _leaky(xt, leaky)
            xt = conv_same(xt, w2_ref[s], b2_ref[s], 1, pad2)
            x = xt + x                                      # residual add (f32)

        o_ref[0] = x.astype(o_ref.dtype)

    # Explicit VMEM budget: double-buffered activations + weights + scratch,
    # with 2x headroom, clamped so it is valid on every generation (v7x: 64 MiB).
    act_bytes = 2 * (L * CP * io_bytes) * 2                 # x + out, double buffered
    w_bytes = 2 * (S * K * CP * CP * mxu_bytes) * 2         # w1 + w2, double buffered
    b_bytes = 2 * (S * CP * 4) * 2
    scratch_bytes = LP * CP * mxu_bytes + L * K * CP * mxu_bytes
    temp_bytes = 6 * L * CP * 4                             # live f32 temporaries
    needed = act_bytes + w_bytes + b_bytes + scratch_bytes + temp_bytes
    vmem_limit = int(min(max(2 * needed, 32 << 20), 64 << 20))

    grid_spec = pltpu.PrefetchScalarGridSpec(
        num_scalar_prefetch=0,
        grid=(NB,),
        in_specs=[
            pl.BlockSpec((1, L, CP), lambda n: (n, 0, 0)),          # x (lane packed)
            # Weights/biases are grid-invariant; pipeline_mode=pl.Buffered(1)
            # would drop their second buffer, omitted for lowering compatibility.
            pl.BlockSpec((S, K * CP, CP), lambda n: (0, 0, 0)),     # w1 (bf16, packed taps)
            pl.BlockSpec((S, 1, CP), lambda n: (0, 0, 0)),          # b1 (f32)
            pl.BlockSpec((S, K * CP, CP), lambda n: (0, 0, 0)),     # w2 (bf16, packed taps)
            pl.BlockSpec((S, 1, CP), lambda n: (0, 0, 0)),          # b2 (f32)
        ],
        out_specs=pl.BlockSpec((1, L, CP), lambda n: (n, 0, 0)),
        scratch_shapes=[
            pltpu.VMEM((LP, CP), mxu_dtype),        # zero-halo activation buffer (bf16)
            pltpu.VMEM((L, K * CP), mxu_dtype),     # packed taps = MXU LHS (bf16)
        ],
    )

    return pl.pallas_call(
        kernel,
        out_shape=jax.ShapeDtypeStruct((NB, L, CP), io_dtype),
        grid_spec=grid_spec,
        compiler_params=pltpu.CompilerParams(
            dimension_semantics=("parallel",),
            vmem_limit_bytes=vmem_limit,
        ),
    )


def _choose_packing(N, C):
    """How many batch samples G share the lane axis (CP = G*C)."""
    if C >= 128:
        return 1
    G = max(1, 128 // C)
    G = min(G, N)
    # Keep NB >= 2 whenever N >= 2 so both TensorCores of a v7x megacore get
    # work on the "parallel" grid axis; a smaller G also avoids the G x
    # zero-FLOP blow-up of block-diagonal packing on v5e's MXU.
    if N >= 2:
        G = min(G, max(1, N // 2))
    return G


def pack_resblock_params(params, kernel_size, C, G, mxu_dtype=jnp.bfloat16):
    """PyTorch Conv1d weights (Cout, Cin, K) -> MXU-ready packed operands.

    Rows of each (K*CP, CP) weight are ordered (k, g, cin) to match the
    in-kernel tap packing; weights are block-diagonal over the G lane-packed
    samples.  Done once per parameter set, outside the kernel.
    """
    K = kernel_size
    CP = G * C
    eye_g = jnp.eye(G, dtype=jnp.float32)

    def pack_w(w):
        wk = jnp.transpose(w, (2, 1, 0)).astype(jnp.float32)        # (K, Cin, Cout)
        wbd = jnp.einsum("gh,kio->kgiho", eye_g, wk)                # (K, G, Cin, G, Cout)
        return wbd.reshape(K * CP, CP).astype(mxu_dtype)

    def pack_b(b):
        return jnp.tile(b.astype(jnp.float32), G).reshape(1, CP)

    w1 = jnp.stack([pack_w(p[0]) for p in params])                  # (S, K*CP, CP)
    b1 = jnp.stack([pack_b(p[1]) for p in params])                  # (S, 1, CP)
    w2 = jnp.stack([pack_w(p[2]) for p in params])
    b2 = jnp.stack([pack_b(p[3]) for p in params])
    return w1, b1, w2, b2


def pack_activations(x_ncl, G):
    """(N, C, L) -> lane-packed channels-last (NB, L, G*C)."""
    N, C, L = x_ncl.shape
    NPAD = _round_up(N, G)
    NB = NPAD // G
    x = jnp.transpose(x_ncl, (0, 2, 1)).astype(jnp.float32)        # (N, L, C)
    if NPAD != N:
        x = jnp.concatenate([x, jnp.zeros((NPAD - N, L, C), x.dtype)], axis=0)
    return x.reshape(NB, G, L, C).transpose(0, 2, 1, 3).reshape(NB, L, G * C)


def unpack_activations(yp, N, C, G):
    """(NB, L, G*C) -> (N, C, L) float32."""
    NB, L, _ = yp.shape
    y = yp.reshape(NB, L, G, C).transpose(0, 2, 1, 3).reshape(NB * G, L, C)[:N]
    return jnp.transpose(y, (0, 2, 1)).astype(jnp.float32)


def resblock_forward_packed(xp, packed_params, kernel_size, dilation, leaky,
                            io_dtype=jnp.float32, mxu_dtype=jnp.bfloat16):
    """Core entry on pre-packed (NB, L, CP) activations.

    Keeping activations in this layout across a whole MRF/ResBlock stack avoids
    per-block HBM transpose/reshape passes (the layout plumbing is hoisted out).
    """
    NB, L, CP = xp.shape
    w1, b1, w2, b2 = packed_params
    call = _make_resblock_call(
        NB, L, CP, kernel_size,
        tuple(int(d) for d in dilation), float(leaky),
        jnp.dtype(io_dtype).name, jnp.dtype(mxu_dtype).name)
    return call(xp.astype(io_dtype), w1, b1, w2, b2)


def resblock_forward(x_ncl, params, kernel_size, dilation, leaky,
                     io_dtype=jnp.float32, mxu_dtype=jnp.bfloat16):
    """x_ncl: (N, C, L) like PyTorch Conv1d input.  Returns (N, C, L) float32."""
    N, C, L = x_ncl.shape
    G = _choose_packing(N, C)
    xp = pack_activations(x_ncl, G)
    packed = pack_resblock_params(params, kernel_size, C, G, mxu_dtype)
    yp = resblock_forward_packed(xp, packed, kernel_size, dilation, leaky,
                                 io_dtype=io_dtype, mxu_dtype=mxu_dtype)
    return unpack_activations(yp, N, C, G)


def resblock_reference(x, params, kernel_size, dilation, leaky, mxu_dtype=None):
    """Pure-JAX reference matching the PyTorch forward (NCL layout).

    If `mxu_dtype` is given, conv operands are rounded to it first so the
    reference reproduces the kernel's mixed precision (bf16 MXU, f32 accum).
    """
    K = kernel_size

    def q(a):
        return a.astype(mxu_dtype).astype(jnp.float32) if mxu_dtype is not None else a

    for (w1, b1, w2, b2), d in zip(params, dilation):
        pad1 = (K * d - d) // 2
        pad2 = (K - 1) // 2
        xt = jnp.where(x > 0, x, leaky * x)
        xt = lax.conv_general_dilated(
            q(xt), q(w1), window_strides=(1,), padding=[(pad1, pad1)],
            rhs_dilation=(d,), dimension_numbers=("NCH", "OIH", "NCH"),
            precision=lax.Precision.HIGHEST,
        ) + b1[None, :, None]
        xt = jnp.where(xt > 0, xt, leaky * xt)
        xt = lax.conv_general_dilated(
            q(xt), q(w2), window_strides=(1,), padding=[(pad2, pad2)],
            rhs_dilation=(1,), dimension_numbers=("NCH", "OIH", "NCH"),
            precision=lax.Precision.HIGHEST,
        ) + b2[None, :, None]
        x = xt + x
    return x


if __name__ == "__main__":
    # Small shapes consistent with ResBlock(channels, kernel_size, dilation, leaky)
    N, C, L = 2, 32, 64
    kernel_size = 3
    dilation = [1, 3]
    leaky = 0.1

    key = jax.random.PRNGKey(0)
    key, kx = jax.random.split(key)
    x = jax.random.normal(kx, (N, C, L), jnp.float32)

    # Deterministic parameters (PyTorch Conv1d weight layout: (Cout, Cin, K)).
    params = []
    for _ in dilation:
        key, k1, k2, k3, k4 = jax.random.split(key, 5)
        w1 = jax.random.normal(k1, (C, C, kernel_size), jnp.float32) * 0.1
        b1 = jax.random.normal(k2, (C,), jnp.float32) * 0.1
        w2 = jax.random.normal(k3, (C, C, kernel_size), jnp.float32) * 0.1
        b2 = jax.random.normal(k4, (C,), jnp.float32) * 0.1
        params.append((w1, b1, w2, b2))

    out = resblock_forward(x, params, kernel_size, dilation, leaky)
    out = jax.block_until_ready(out)
    assert out.shape == (N, C, L)

    # Strict check vs. a reference emulating the kernel's bf16-MXU / f32-accum precision.
    ref_bf16 = resblock_reference(x, params, kernel_size, dilation, leaky,
                                  mxu_dtype=jnp.bfloat16)
    err_strict = float(jnp.max(jnp.abs(out - ref_bf16)))
    assert jnp.allclose(out, ref_bf16, atol=2e-3, rtol=2e-3), err_strict

    # Loose sanity check vs. the exact f32 reference (difference = bf16 MXU rounding only).
    ref_f32 = resblock_reference(x, params, kernel_size, dilation, leaky)
    err_f32 = float(jnp.max(jnp.abs(out - ref_f32)))
    assert jnp.allclose(out, ref_f32, atol=1e-1, rtol=1e-1), err_f32

    print("KERNEL_OK")
</pallas_src>

<mosaic_0001>
module attributes {stable_mosaic.version = 11 : i64} {
  func.func @kernel(%arg0: i32, %arg1: memref<1x64x32xf32, #tpu.memory_space<vmem>>, %arg2: memref<2x96x32xbf16, #tpu.memory_space<vmem>>, %arg3: memref<2x1x32xf32, #tpu.memory_space<vmem>>, %arg4: memref<2x96x32xbf16, #tpu.memory_space<vmem>>, %arg5: memref<2x1x32xf32, #tpu.memory_space<vmem>>, %arg6: memref<1x64x32xf32, #tpu.memory_space<vmem>>, %arg7: memref<96x32xbf16, #tpu.memory_space<vmem>>, %arg8: memref<64x96xbf16, #tpu.memory_space<vmem>>) attributes {dimension_semantics = [#tpu.dimension_semantics<parallel>], iteration_bounds = array<i64: 2>, scalar_prefetch = 0 : i64, scratch_operands = 2 : i64, tpu.core_type = #tpu.core_type<tc>, window_params = [{transform_indices = @transform_0, window_bounds = array<i64: 1, 64, 32>}, {pipeline_mode = #tpu.pipeline_mode<synchronous>, transform_indices = @transform_1, window_bounds = array<i64: 2, 96, 32>}, {pipeline_mode = #tpu.pipeline_mode<synchronous>, transform_indices = @transform_2, window_bounds = array<i64: 2, 1, 32>}, {pipeline_mode = #tpu.pipeline_mode<synchronous>, transform_indices = @transform_3, window_bounds = array<i64: 2, 96, 32>}, {pipeline_mode = #tpu.pipeline_mode<synchronous>, transform_indices = @transform_4, window_bounds = array<i64: 2, 1, 32>}, {transform_indices = @transform_5, window_bounds = array<i64: 1, 64, 32>}]} {
    %cst = arith.constant 0.000000e+00 : bf16
    %0 = vector.broadcast %cst : bf16 to vector<16x32xbf16>
    %c0 = arith.constant 0 : index
    %c0_0 = arith.constant 0 : index
    %1 = vector.load %arg7[%c0, %c0_0] : memref<96x32xbf16, #tpu.memory_space<vmem>>, vector<16x32xbf16>
    tpu.vector_store %arg7[%c0, %c0_0], %0 {strides = array<i32>} : memref<96x32xbf16, #tpu.memory_space<vmem>>, vector<16x32xbf16>,
    %cst_1 = arith.constant 0.000000e+00 : bf16
    %2 = vector.broadcast %cst_1 : bf16 to vector<16x32xbf16>
    %c80 = arith.constant 80 : index
    %c0_2 = arith.constant 0 : index
    %3 = vector.load %arg7[%c80, %c0_2] : memref<96x32xbf16, #tpu.memory_space<vmem>>, vector<16x32xbf16>
    tpu.vector_store %arg7[%c80, %c0_2], %2 {strides = array<i32>} : memref<96x32xbf16, #tpu.memory_space<vmem>>, vector<16x32xbf16>,
    %c0_3 = arith.constant 0 : index
    %c0_4 = arith.constant 0 : index
    %c0_5 = arith.constant 0 : index
    %4 = vector.load %arg1[%c0_3, %c0_4, %c0_5] : memref<1x64x32xf32, #tpu.memory_space<vmem>>, vector<1x64x32xf32>
    %5 = vector.shape_cast %4 : vector<1x64x32xf32> to vector<64x32xf32>
    %cst_6 = arith.constant 0.000000e+00 : f32
    %6 = vector.broadcast %cst_6 : f32 to vector<64x32xf32>
    %7 = arith.cmpf ogt, %5, %6 : vector<64x32xf32>
    %cst_7 = arith.constant 1.000000e-01 : f32
    %8 = vector.broadcast %cst_7 : f32 to vector<64x32xf32>
    %9 = arith.mulf %8, %5 : vector<64x32xf32>
    %10 = arith.select %7, %5, %9 : vector<64x32xi1>, vector<64x32xf32>
    %c0_8 = arith.constant 0 : index
    %c0_9 = arith.constant 0 : index
    %c0_10 = arith.constant 0 : index
    %11 = vector.load %arg2[%c0_8, %c0_9, %c0_10] : memref<2x96x32xbf16, #tpu.memory_space<vmem>>, vector<1x96x32xbf16>
    %12 = vector.shape_cast %11 : vector<1x96x32xbf16> to vector<96x32xbf16>
    %c0_11 = arith.constant 0 : index
    %c0_12 = arith.constant 0 : index
    %c0_13 = arith.constant 0 : index
    %13 = vector.load %arg3[%c0_11, %c0_12, %c0_13] : memref<2x1x32xf32, #tpu.memory_space<vmem>>, vector<1x1x32xf32>
    %14 = vector.shape_cast %13 : vector<1x1x32xf32> to vector<1x32xf32>
    %15 = arith.truncf %10 : vector<64x32xf32> to vector<64x32xbf16>
    %c16 = arith.constant 16 : index
    %c0_14 = arith.constant 0 : index
    %16 = vector.load %arg7[%c16, %c0_14] : memref<96x32xbf16, #tpu.memory_space<vmem>>, vector<64x32xbf16>
    tpu.vector_store %arg7[%c16, %c0_14], %15 {strides = array<i32>} : memref<96x32xbf16, #tpu.memory_space<vmem>>, vector<64x32xbf16>,
    %c15 = arith.constant 15 : index
    %c0_15 = arith.constant 0 : index
    %17 = vector.load %arg7[%c15, %c0_15] : memref<96x32xbf16, #tpu.memory_space<vmem>>, vector<64x32xbf16>
    %c0_16 = arith.constant 0 : index
    %c0_17 = arith.constant 0 : index
    %18 = vector.load %arg8[%c0_16, %c0_17] : memref<64x96xbf16, #tpu.memory_space<vmem>>, vector<64x32xbf16>
    tpu.vector_store %arg8[%c0_16, %c0_17], %17 {strides = array<i32>} : memref<64x96xbf16, #tpu.memory_space<vmem>>, vector<64x32xbf16>,
    %c16_18 = arith.constant 16 : index
    %c0_19 = arith.constant 0 : index
    %19 = vector.load %arg7[%c16_18, %c0_19] : memref<96x32xbf16, #tpu.memory_space<vmem>>, vector<64x32xbf16>
    %c0_20 = arith.constant 0 : index
    %c32 = arith.constant 32 : index
    %20 = vector.load %arg8[%c0_20, %c32] : memref<64x96xbf16, #tpu.memory_space<vmem>>, vector<64x32xbf16>
    tpu.vector_store %arg8[%c0_20, %c32], %19 {strides = array<i32>} : memref<64x96xbf16, #tpu.memory_space<vmem>>, vector<64x32xbf16>,
    %c17 = arith.constant 17 : index
    %c0_21 = arith.constant 0 : index
    %21 = vector.load %arg7[%c17, %c0_21] : memref<96x32xbf16, #tpu.memory_space<vmem>>, vector<64x32xbf16>
    %c0_22 = arith.constant 0 : index
    %c64 = arith.constant 64 : index
    %22 = vector.load %arg8[%c0_22, %c64] : memref<64x96xbf16, #tpu.memory_space<vmem>>, vector<64x32xbf16>
    tpu.vector_store %arg8[%c0_22, %c64], %21 {strides = array<i32>} : memref<64x96xbf16, #tpu.memory_space<vmem>>, vector<64x32xbf16>,
    %c0_23 = arith.constant 0 : index
    %c0_24 = arith.constant 0 : index
    %23 = vector.load %arg8[%c0_23, %c0_24] : memref<64x96xbf16, #tpu.memory_space<vmem>>, vector<64x96xbf16>
    %cst_25 = arith.constant dense<0.000000e+00> : vector<64x32xf32>
    %24 = tpu.matmul %23, %12, %cst_25 {dimension_numbers = #tpu.dot_dimension_numbers<[1], [0], [0], [1], [0, 0, 1, 1], [], []>} : vector<64x96xbf16>, vector<96x32xbf16>, vector<64x32xf32> -> vector<64x32xf32>
    %25 = vector.broadcast %14 : vector<1x32xf32> to vector<64x32xf32>
    %26 = arith.addf %24, %25 : vector<64x32xf32>
    %cst_26 = arith.constant 0.000000e+00 : f32
    %27 = vector.broadcast %cst_26 : f32 to vector<64x32xf32>
    %28 = arith.cmpf ogt, %26, %27 : vector<64x32xf32>
    %cst_27 = arith.constant 1.000000e-01 : f32
    %29 = vector.broadcast %cst_27 : f32 to vector<64x32xf32>
    %30 = arith.mulf %29, %26 : vector<64x32xf32>
    %31 = arith.select %28, %26, %30 : vector<64x32xi1>, vector<64x32xf32>
    %c0_28 = arith.constant 0 : index
    %c0_29 = arith.constant 0 : index
    %c0_30 = arith.constant 0 : index
    %32 = vector.load %arg4[%c0_28, %c0_29, %c0_30] : memref<2x96x32xbf16, #tpu.memory_space<vmem>>, vector<1x96x32xbf16>
    %33 = vector.shape_cast %32 : vector<1x96x32xbf16> to vector<96x32xbf16>
    %c0_31 = arith.constant 0 : index
    %c0_32 = arith.constant 0 : index
    %c0_33 = arith.constant 0 : index
    %34 = vector.load %arg5[%c0_31, %c0_32, %c0_33] : memref<2x1x32xf32, #tpu.memory_space<vmem>>, vector<1x1x32xf32>
    %35 = vector.shape_cast %34 : vector<1x1x32xf32> to vector<1x32xf32>
    %36 = arith.truncf %31 : vector<64x32xf32> to vector<64x32xbf16>
    %c16_34 = arith.constant 16 : index
    %c0_35 = arith.constant 0 : index
    %37 = vector.load %arg7[%c16_34, %c0_35] : memref<96x32xbf16, #tpu.memory_space<vmem>>, vector<64x32xbf16>
    tpu.vector_store %arg7[%c16_34, %c0_35], %36 {strides = array<i32>} : memref<96x32xbf16, #tpu.memory_space<vmem>>, vector<64x32xbf16>,
    %c15_36 = arith.constant 15 : index
    %c0_37 = arith.constant 0 : index
    %38 = vector.load %arg7[%c15_36, %c0_37] : memref<96x32xbf16, #tpu.memory_space<vmem>>, vector<64x32xbf16>
    %c0_38 = arith.constant 0 : index
    %c0_39 = arith.constant 0 : index
    %39 = vector.load %arg8[%c0_38, %c0_39] : memref<64x96xbf16, #tpu.memory_space<vmem>>, vector<64x32xbf16>
    tpu.vector_store %arg8[%c0_38, %c0_39], %38 {strides = array<i32>} : memref<64x96xbf16, #tpu.memory_space<vmem>>, vector<64x32xbf16>,
    %c16_40 = arith.constant 16 : index
    %c0_41 = arith.constant 0 : index
    %40 = vector.load %arg7[%c16_40, %c0_41] : memref<96x32xbf16, #tpu.memory_space<vmem>>, vector<64x32xbf16>
    %c0_42 = arith.constant 0 : index
    %c32_43 = arith.constant 32 : index
    %41 = vector.load %arg8[%c0_42, %c32_43] : memref<64x96xbf16, #tpu.memory_space<vmem>>, vector<64x32xbf16>
    tpu.vector_store %arg8[%c0_42, %c32_43], %40 {strides = array<i32>} : memref<64x96xbf16, #tpu.memory_space<vmem>>, vector<64x32xbf16>,
    %c17_44 = arith.constant 17 : index
    %c0_45 = arith.constant 0 : index
    %42 = vector.load %arg7[%c17_44, %c0_45] : memref<96x32xbf16, #tpu.memory_space<vmem>>, vector<64x32xbf16>
    %c0_46 = arith.constant 0 : index
    %c64_47 = arith.constant 64 : index
    %43 = vector.load %arg8[%c0_46, %c64_47] : memref<64x96xbf16, #tpu.memory_space<vmem>>, vector<64x32xbf16>
    tpu.vector_store %arg8[%c0_46, %c64_47], %42 {strides = array<i32>} : memref<64x96xbf16, #tpu.memory_space<vmem>>, vector<64x32xbf16>,
    %c0_48 = arith.constant 0 : index
    %c0_49 = arith.constant 0 : index
    %44 = vector.load %arg8[%c0_48, %c0_49] : memref<64x96xbf16, #tpu.memory_space<vmem>>, vector<64x96xbf16>
    %cst_50 = arith.constant dense<0.000000e+00> : vector<64x32xf32>
    %45 = tpu.matmul %44, %33, %cst_50 {dimension_numbers = #tpu.dot_dimension_numbers<[1], [0], [0], [1], [0, 0, 1, 1], [], []>} : vector<64x96xbf16>, vector<96x32xbf16>, vector<64x32xf32> -> vector<64x32xf32>
    %46 = vector.broadcast %35 : vector<1x32xf32> to vector<64x32xf32>
    %47 = arith.addf %45, %46 : vector<64x32xf32>
    %48 = arith.addf %47, %5 : vector<64x32xf32>
    %cst_51 = arith.constant 0.000000e+00 : f32
    %49 = vector.broadcast %cst_51 : f32 to vector<64x32xf32>
    %50 = arith.cmpf ogt, %48, %49 : vector<64x32xf32>
    %cst_52 = arith.constant 1.000000e-01 : f32
    %51 = vector.broadcast %cst_52 : f32 to vector<64x32xf32>
    %52 = arith.mulf %51, %48 : vector<64x32xf32>
    %53 = arith.select %50, %48, %52 : vector<64x32xi1>, vector<64x32xf32>
    %c1 = arith.constant 1 : index
    %c0_53 = arith.constant 0 : index
    %c0_54 = arith.constant 0 : index
    %54 = vector.load %arg2[%c1, %c0_53, %c0_54] : memref<2x96x32xbf16, #tpu.memory_space<vmem>>, vector<1x96x32xbf16>
    %55 = vector.shape_cast %54 : vector<1x96x32xbf16> to vector<96x32xbf16>
    %c1_55 = arith.constant 1 : index
    %c0_56 = arith.constant 0 : index
    %c0_57 = arith.constant 0 : index
    %56 = vector.load %arg3[%c1_55, %c0_56, %c0_57] : memref<2x1x32xf32, #tpu.memory_space<vmem>>, vector<1x1x32xf32>
    %57 = vector.shape_cast %56 : vector<1x1x32xf32> to vector<1x32xf32>
    %58 = arith.truncf %53 : vector<64x32xf32> to vector<64x32xbf16>
    %c16_58 = arith.constant 16 : index
    %c0_59 = arith.constant 0 : index
    %59 = vector.load %arg7[%c16_58, %c0_59] : memref<96x32xbf16, #tpu.memory_space<vmem>>, vector<64x32xbf16>
    tpu.vector_store %arg7[%c16_58, %c0_59], %58 {strides = array<i32>} : memref<96x32xbf16, #tpu.memory_space<vmem>>, vector<64x32xbf16>,
    %c13 = arith.constant 13 : index
    %c0_60 = arith.constant 0 : index
    %60 = vector.load %arg7[%c13, %c0_60] : memref<96x32xbf16, #tpu.memory_space<vmem>>, vector<64x32xbf16>
    %c0_61 = arith.constant 0 : index
    %c0_62 = arith.constant 0 : index
    %61 = vector.load %arg8[%c0_61, %c0_62] : memref<64x96xbf16, #tpu.memory_space<vmem>>, vector<64x32xbf16>
    tpu.vector_store %arg8[%c0_61, %c0_62], %60 {strides = array<i32>} : memref<64x96xbf16, #tpu.memory_space<vmem>>, vector<64x32xbf16>,
    %c16_63 = arith.constant 16 : index
    %c0_64 = arith.constant 0 : index
    %62 = vector.load %arg7[%c16_63, %c0_64] : memref<96x32xbf16, #tpu.memory_space<vmem>>, vector<64x32xbf16>
    %c0_65 = arith.constant 0 : index
    %c32_66 = arith.constant 32 : index
    %63 = vector.load %arg8[%c0_65, %c32_66] : memref<64x96xbf16, #tpu.memory_space<vmem>>, vector<64x32xbf16>
    tpu.vector_store %arg8[%c0_65, %c32_66], %62 {strides = array<i32>} : memref<64x96xbf16, #tpu.memory_space<vmem>>, vector<64x32xbf16>,
    %c19 = arith.constant 19 : index
    %c0_67 = arith.constant 0 : index
    %64 = vector.load %arg7[%c19, %c0_67] : memref<96x32xbf16, #tpu.memory_space<vmem>>, vector<64x32xbf16>
    %c0_68 = arith.constant 0 : index
    %c64_69 = arith.constant 64 : index
    %65 = vector.load %arg8[%c0_68, %c64_69] : memref<64x96xbf16, #tpu.memory_space<vmem>>, vector<64x32xbf16>
    tpu.vector_store %arg8[%c0_68, %c64_69], %64 {strides = array<i32>} : memref<64x96xbf16, #tpu.memory_space<vmem>>, vector<64x32xbf16>,
    %c0_70 = arith.constant 0 : index
    %c0_71 = arith.constant 0 : index
    %66 = vector.load %arg8[%c0_70, %c0_71] : memref<64x96xbf16, #tpu.memory_space<vmem>>, vector<64x96xbf16>
    %cst_72 = arith.constant dense<0.000000e+00> : vector<64x32xf32>
    %67 = tpu.matmul %66, %55, %cst_72 {dimension_numbers = #tpu.dot_dimension_numbers<[1], [0], [0], [1], [0, 0, 1, 1], [], []>} : vector<64x96xbf16>, vector<96x32xbf16>, vector<64x32xf32> -> vector<64x32xf32>
    %68 = vector.broadcast %57 : vector<1x32xf32> to vector<64x32xf32>
    %69 = arith.addf %67, %68 : vector<64x32xf32>
    %cst_73 = arith.constant 0.000000e+00 : f32
    %70 = vector.broadcast %cst_73 : f32 to vector<64x32xf32>
    %71 = arith.cmpf ogt, %69, %70 : vector<64x32xf32>
    %cst_74 = arith.constant 1.000000e-01 : f32
    %72 = vector.broadcast %cst_74 : f32 to vector<64x32xf32>
    %73 = arith.mulf %72, %69 : vector<64x32xf32>
    %74 = arith.select %71, %69, %73 : vector<64x32xi1>, vector<64x32xf32>
    %c1_75 = arith.constant 1 : index
    %c0_76 = arith.constant 0 : index
    %c0_77 = arith.constant 0 : index
    %75 = vector.load %arg4[%c1_75, %c0_76, %c0_77] : memref<2x96x32xbf16, #tpu.memory_space<vmem>>, vector<1x96x32xbf16>
    %76 = vector.shape_cast %75 : vector<1x96x32xbf16> to vector<96x32xbf16>
    %c1_78 = arith.constant 1 : index
    %c0_79 = arith.constant 0 : index
    %c0_80 = arith.constant 0 : index
    %77 = vector.load %arg5[%c1_78, %c0_79, %c0_80] : memref<2x1x32xf32, #tpu.memory_space<vmem>>, vector<1x1x32xf32>
    %78 = vector.shape_cast %77 : vector<1x1x32xf32> to vector<1x32xf32>
    %79 = arith.truncf %74 : vector<64x32xf32> to vector<64x32xbf16>
    %c16_81 = arith.constant 16 : index
    %c0_82 = arith.constant 0 : index
    %80 = vector.load %arg7[%c16_81, %c0_82] : memref<96x32xbf16, #tpu.memory_space<vmem>>, vector<64x32xbf16>
    tpu.vector_store %arg7[%c16_81, %c0_82], %79 {strides = array<i32>} : memref<96x32xbf16, #tpu.memory_space<vmem>>, vector<64x32xbf16>,
    %c15_83 = arith.constant 15 : index
    %c0_84 = arith.constant 0 : index
    %81 = vector.load %arg7[%c15_83, %c0_84] : memref<96x32xbf16, #tpu.memory_space<vmem>>, vector<64x32xbf16>
    %c0_85 = arith.constant 0 : index
    %c0_86 = arith.constant 0 : index
    %82 = vector.load %arg8[%c0_85, %c0_86] : memref<64x96xbf16, #tpu.memory_space<vmem>>, vector<64x32xbf16>
    tpu.vector_store %arg8[%c0_85, %c0_86], %81 {strides = array<i32>} : memref<64x96xbf16, #tpu.memory_space<vmem>>, vector<64x32xbf16>,
    %c16_87 = arith.constant 16 : index
    %c0_88 = arith.constant 0 : index
    %83 = vector.load %arg7[%c16_87, %c0_88] : memref<96x32xbf16, #tpu.memory_space<vmem>>, vector<64x32xbf16>
    %c0_89 = arith.constant 0 : index
    %c32_90 = arith.constant 32 : index
    %84 = vector.load %arg8[%c0_89, %c32_90] : memref<64x96xbf16, #tpu.memory_space<vmem>>, vector<64x32xbf16>
    tpu.vector_store %arg8[%c0_89, %c32_90], %83 {strides = array<i32>} : memref<64x96xbf16, #tpu.memory_space<vmem>>, vector<64x32xbf16>,
    %c17_91 = arith.constant 17 : index
    %c0_92 = arith.constant 0 : index
    %85 = vector.load %arg7[%c17_91, %c0_92] : memref<96x32xbf16, #tpu.memory_space<vmem>>, vector<64x32xbf16>
    %c0_93 = arith.constant 0 : index
    %c64_94 = arith.constant 64 : index
    %86 = vector.load %arg8[%c0_93, %c64_94] : memref<64x96xbf16, #tpu.memory_space<vmem>>, vector<64x32xbf16>
    tpu.vector_store %arg8[%c0_93, %c64_94], %85 {strides = array<i32>} : memref<64x96xbf16, #tpu.memory_space<vmem>>, vector<64x32xbf16>,
    %c0_95 = arith.constant 0 : index
    %c0_96 = arith.constant 0 : index
    %87 = vector.load %arg8[%c0_95, %c0_96] : memref<64x96xbf16, #tpu.memory_space<vmem>>, vector<64x96xbf16>
    %cst_97 = arith.constant dense<0.000000e+00> : vector<64x32xf32>
    %88 = tpu.matmul %87, %76, %cst_97 {dimension_numbers = #tpu.dot_dimension_numbers<[1], [0], [0], [1], [0, 0, 1, 1], [], []>} : vector<64x96xbf16>, vector<96x32xbf16>, vector<64x32xf32> -> vector<64x32xf32>
    %89 = vector.broadcast %78 : vector<1x32xf32> to vector<64x32xf32>
    %90 = arith.addf %88, %89 : vector<64x32xf32>
    %91 = arith.addf %90, %48 : vector<64x32xf32>
    %c0_98 = arith.constant 0 : index
    %c0_99 = arith.constant 0 : index
    %c0_100 = arith.constant 0 : index
    %92 = vector.load %arg6[%c0_98, %c0_99, %c0_100] : memref<1x64x32xf32, #tpu.memory_space<vmem>>, vector<1x64x32xf32>
    %93 = vector.shape_cast %92 : vector<1x64x32xf32> to vector<64x32xf32>
    %94 = vector.shape_cast %91 : vector<64x32xf32> to vector<1x64x32xf32>
    tpu.vector_store %arg6[%c0_98, %c0_99, %c0_100], %94 {strides = array<i32>} : memref<1x64x32xf32, #tpu.memory_space<vmem>>, vector<1x64x32xf32>,
    return
  }
  func.func @transform_0(%arg0: i32) -> (i32, i32, i32) {
    %c0_i32 = arith.constant 0 : i32
    %c0_i32_0 = arith.constant 0 : i32
    %c0_i32_1 = arith.constant 0 : i32
    return %arg0, %c0_i32, %c0_i32_0 : i32, i32, i32
  }
  func.func @transform_1(%arg0: i32) -> (i32, i32, i32) {
    %c0_i32 = arith.constant 0 : i32
    %c0_i32_0 = arith.constant 0 : i32
    %c0_i32_1 = arith.constant 0 : i32
    %c0_i32_2 = arith.constant 0 : i32
    return %c0_i32, %c0_i32_0, %c0_i32_1 : i32, i32, i32
  }
  func.func @transform_2(%arg0: i32) -> (i32, i32, i32) {
    %c0_i32 = arith.constant 0 : i32
    %c0_i32_0 = arith.constant 0 : i32
    %c0_i32_1 = arith.constant 0 : i32
    %c0_i32_2 = arith.constant 0 : i32
    return %c0_i32, %c0_i32_0, %c0_i32_1 : i32, i32, i32
  }
  func.func @transform_3(%arg0: i32) -> (i32, i32, i32) {
    %c0_i32 = arith.constant 0 : i32
    %c0_i32_0 = arith.constant 0 : i32
    %c0_i32_1 = arith.constant 0 : i32
    %c0_i32_2 = arith.constant 0 : i32
    return %c0_i32, %c0_i32_0, %c0_i32_1 : i32, i32, i32
  }
  func.func @transform_4(%arg0: i32) -> (i32, i32, i32) {
    %c0_i32 = arith.constant 0 : i32
    %c0_i32_0 = arith.constant 0 : i32
    %c0_i32_1 = arith.constant 0 : i32
    %c0_i32_2 = arith.constant 0 : i32
    return %c0_i32, %c0_i32_0, %c0_i32_1 : i32, i32, i32
  }
  func.func @transform_5(%arg0: i32) -> (i32, i32, i32) {
    %c0_i32 = arith.constant 0 : i32
    %c0_i32_0 = arith.constant 0 : i32
    %c0_i32_1 = arith.constant 0 : i32
    return %arg0, %c0_i32, %c0_i32_0 : i32, i32, i32
  }
}

</mosaic_0001>

<llo_original>
// kernel: tpu_custom_call.1
$region0: #{tpu_custom_call.1}
  #allocation0 [shape = 'u32[]', space=smem, size = 0x4, offset = 0x4, fixed_abs, tag = 'smem constant byte address 0x4 - core index']
  #allocation1 [shape = 'u32[144,128]{1,0:T(1,128)}', space=vmem, size = 0x12000, scoped, tag = 'internal scratch']
  #allocation2 [shape = 'bf16[96,32]{1,0:T(16,128)(2,1)}', space=vmem, size = 0x6000, scoped, tag = 'scratch operand']
  #allocation3 [shape = 'bf16[64,96]{1,0:T(16,128)(2,1)}', space=vmem, size = 0x4000, scoped, tag = 'scratch operand']
  %s0 = inlined_call_operand.vmem [shape: f32[2,64,32], index: 0, kind: input, shape index: {}]
  %s1 = inlined_call_operand.vmem [shape: bf16[2,96,32], index: 1, kind: input, shape index: {}]
  %s2 = inlined_call_operand.vmem [shape: f32[2,1,32], index: 2, kind: input, shape index: {}]
  %s3 = inlined_call_operand.vmem [shape: bf16[2,96,32], index: 3, kind: input, shape index: {}]
  %s4 = inlined_call_operand.vmem [shape: f32[2,1,32], index: 4, kind: input, shape index: {}]
  %s5 = inlined_call_operand.vmem [shape: f32[2,64,32], index: 5, kind: output, shape index: {}]
  %s6 = sld [smem:[#allocation0]]
  $region53: #{tpu_custom_call.1} parent=0
    _
  %s8 = ssub.s32 1, %s6
  %s9 = scalar_select 0, %s8, %s6
  loop: start=0, step=1, limit=4
  $region2: #{tpu_custom_call.1} parent=0 // loop_pre_header
    _
  $region3: #{tpu_custom_call.1} parent=0 // loop_header
    %s11 = sphi 0, %s15
    %p12 = scmp.ge.s32.totalorder %s11, 4
    %s21 = sphi 0, %s23
    %s24 = sphi 0, %s21
    %s25 = sphi 0, %s24
    %s41 = sphi 0, %s25
    %s45 = sphi 0, %s45
    %s47 = sphi 0, %s45
    %s48 = sphi 0, %s47
    %s62 = sphi 0, %s48
    %s66 = sphi 0, %s66
    %s68 = sphi 0, %s66
    %s69 = sphi 0, %s68
    %s83 = sphi 0, %s69
    %s87 = sphi 0, %s87
    %s89 = sphi 0, %s87
    %s90 = sphi 0, %s89
    %s104 = sphi 0, %s90
    %s108 = sphi 0, %s108
    %s110 = sphi 0, %s108
    %s111 = sphi 0, %s110
    %s125 = sphi 0, %s111
    %s131 = sphi 0, %s133
    %s134 = sphi 0, %s131
    %s135 = sphi 0, %s134
    %s151 = sphi 0, %s135
  $region4: #{tpu_custom_call.1} parent=0 // loop_header_branch
    %14 = sbr.rel (%p12) target = $region8
  $region5: #{tpu_custom_call.1} parent=0 // loop_body
    %s16 = ssub.s32 %s11, 1
    %s17 = ssub.s32 %s11, 2
    %s18 = sadd.s32 %s11, 1
    %s19 = ssub.s32 %s11, %s18
    %p20 = scmp.eq.s32.totalorder %s19, 0
    %s22 = sadd.s32 %s21, 1
    %s23 = scalar_select %p20, %s21, %s22
    %p26 = pneg %p20
    %p27 = scmp.eq.s32.totalorder %s11, 1
    %p28 = por %p26, %p27
    %p29 = scmp.ne.s32.totalorder %s21, %s24
    %p30 = scmp.eq.s32.totalorder %s11, 0
    %p31 = por %p29, %p30
    %p32 = scmp.ne.s32.totalorder %s21, %s24
    %p33 = scmp.eq.s32.totalorder %s16, 1
    %p34 = por %p32, %p33
    %p35 = scmp.ne.s32.totalorder %s24, %s25
    %p36 = scmp.eq.s32.totalorder %s16, 0
    %p37 = por %p35, %p36
    %p38 = scmp.ne.s32.totalorder %s24, %s25
    %p39 = scmp.eq.s32.totalorder %s17, 1
    %p40 = por %p38, %p39
    %p42 = scmp.ne.s32.totalorder %s25, %s41
    %p43 = scmp.eq.s32.totalorder %s17, 0
    %p44 = por %p42, %p43
    %s46 = sadd.s32 %s45, 1
    %p49 = scmp.eq.s32.totalorder %s11, 1
    %p50 = scmp.ne.s32.totalorder %s45, %s47
    %p51 = scmp.eq.s32.totalorder %s11, 0
    %p52 = por %p50, %p51
    %p53 = scmp.ne.s32.totalorder %s45, %s47
    %p54 = scmp.eq.s32.totalorder %s16, 1
    %p55 = por %p53, %p54
    %p56 = scmp.ne.s32.totalorder %s47, %s48
    %p57 = scmp.eq.s32.totalorder %s16, 0
    %p58 = por %p56, %p57
    %p59 = scmp.ne.s32.totalorder %s47, %s48
    %p60 = scmp.eq.s32.totalorder %s17, 1
    %p61 = por %p59, %p60
    %p63 = scmp.ne.s32.totalorder %s48, %s62
    %p64 = scmp.eq.s32.totalorder %s17, 0
    %p65 = por %p63, %p64
    %s67 = sadd.s32 %s66, 1
    %p70 = scmp.eq.s32.totalorder %s11, 1
    %p71 = scmp.ne.s32.totalorder %s66, %s68
    %p72 = scmp.eq.s32.totalorder %s11, 0
    %p73 = por %p71, %p72
    %p74 = scmp.ne.s32.totalorder %s66, %s68
    %p75 = scmp.eq.s32.totalorder %s16, 1
    %p76 = por %p74, %p75
    %p77 = scmp.ne.s32.totalorder %s68, %s69
    %p78 = scmp.eq.s32.totalorder %s16, 0
    %p79 = por %p77, %p78
    %p80 = scmp.ne.s32.totalorder %s68, %s69
    %p81 = scmp.eq.s32.totalorder %s17, 1
    %p82 = por %p80, %p81
    %p84 = scmp.ne.s32.totalorder %s69, %s83
    %p85 = scmp.eq.s32.totalorder %s17, 0
    %p86 = por %p84, %p85
    %s88 = sadd.s32 %s87, 1
    %p91 = scmp.eq.s32.totalorder %s11, 1
    %p92 = scmp.ne.s32.totalorder %s87, %s89
    %p93 = scmp.eq.s32.totalorder %s11, 0
    %p94 = por %p92, %p93
    %p95 = scmp.ne.s32.totalorder %s87, %s89
    %p96 = scmp.eq.s32.totalorder %s16, 1
    %p97 = por %p95, %p96
    %p98 = scmp.ne.s32.totalorder %s89, %s90
    %p99 = scmp.eq.s32.totalorder %s16, 0
    %p100 = por %p98, %p99
    %p101 = scmp.ne.s32.totalorder %s89, %s90
    %p102 = scmp.eq.s32.totalorder %s17, 1
    %p103 = por %p101, %p102
    %p105 = scmp.ne.s32.totalorder %s90, %s104
    %p106 = scmp.eq.s32.totalorder %s17, 0
    %p107 = por %p105, %p106
    %s109 = sadd.s32 %s108, 1
    %p112 = scmp.eq.s32.totalorder %s11, 1
    %p113 = scmp.ne.s32.totalorder %s108, %s110
    %p114 = scmp.eq.s32.totalorder %s11, 0
    %p115 = por %p113, %p114
    %p116 = scmp.ne.s32.totalorder %s108, %s110
    %p117 = scmp.eq.s32.totalorder %s16, 1
    %p118 = por %p116, %p117
    %p119 = scmp.ne.s32.totalorder %s110, %s111
    %p120 = scmp.eq.s32.totalorder %s16, 0
    %p121 = por %p119, %p120
    %p122 = scmp.ne.s32.totalorder %s110, %s111
    %p123 = scmp.eq.s32.totalorder %s17, 1
    %p124 = por %p122, %p123
    %p126 = scmp.ne.s32.totalorder %s111, %s125
    %p127 = scmp.eq.s32.totalorder %s17, 0
    %p128 = por %p126, %p127
    %s129 = ssub.s32 %s11, %s18
    %p130 = scmp.eq.s32.totalorder %s129, 0
    %s132 = sadd.s32 %s131, 1
    %s133 = scalar_select %p130, %s131, %s132
    %p136 = pneg %p130
    %p137 = scmp.eq.s32.totalorder %s11, 1
    %p138 = por %p136, %p137
    %p139 = scmp.ne.s32.totalorder %s131, %s134
    %p140 = scmp.eq.s32.totalorder %s11, 0
    %p141 = por %p139, %p140
    %p142 = scmp.ne.s32.totalorder %s131, %s134
    %p143 = scmp.eq.s32.totalorder %s16, 1
    %p144 = por %p142, %p143
    %p145 = scmp.ne.s32.totalorder %s134, %s135
    %p146 = scmp.eq.s32.totalorder %s16, 0
    %p147 = por %p145, %p146
    %p148 = scmp.ne.s32.totalorder %s134, %s135
    %p149 = scmp.eq.s32.totalorder %s17, 1
    %p150 = por %p148, %p149
    %p152 = scmp.ne.s32.totalorder %s135, %s151
    %p153 = scmp.eq.s32.totalorder %s17, 0
    %p154 = por %p152, %p153
    %p155 = scmp.le.s32.totalorder 1, %s11
    %p156 = scmp.lt.s32.totalorder %s11, 3
    %p157 = pnand %p155, %p156
    %p158 = pneg %p157
    // Predicated region
    $region9: #{tpu_custom_call.1} parent=5 // pred_check
      _
    $region10: #{tpu_custom_call.1} parent=5 // pred_check_branch
      %160 = sbr.rel (%p157) target = $region12
    $region11: #{tpu_custom_call.1} parent=5 // pred_region
      %s161 = ssub.s32 %s11, 1
      // Predicated region
      $region13: #{tpu_custom_call.1} parent=11 // pred_check
        %p162 = pneg %p58
      $region14: #{tpu_custom_call.1} parent=11 // pred_check_branch
        %164 = sbr.rel (%p162) target = $region16
      $region15: #{tpu_custom_call.1} parent=11 // pred_region
        _
      $region16: #{tpu_custom_call.1} parent=11 // pred_fallthru
        _
      // Predicated region
      $region17: #{tpu_custom_call.1} parent=11 // pred_check
        %p165 = pneg %p79
      $region18: #{tpu_custom_call.1} parent=11 // pred_check_branch
        %167 = sbr.rel (%p165) target = $region20
      $region19: #{tpu_custom_call.1} parent=11 // pred_region
        _
      $region20: #{tpu_custom_call.1} parent=11 // pred_fallthru
        _
      // Predicated region
      $region21: #{tpu_custom_call.1} parent=11 // pred_check
        %p168 = pneg %p100
      $region22: #{tpu_custom_call.1} parent=11 // pred_check_branch
        %170 = sbr.rel (%p168) target = $region24
      $region23: #{tpu_custom_call.1} parent=11 // pred_region
        _
      $region24: #{tpu_custom_call.1} parent=11 // pred_fallthru
        _
      // Predicated region
      $region25: #{tpu_custom_call.1} parent=11 // pred_check
        %p171 = pneg %p121
      $region26: #{tpu_custom_call.1} parent=11 // pred_check_branch
        %173 = sbr.rel (%p171) target = $region28
      $region27: #{tpu_custom_call.1} parent=11 // pred_region
        _
      $region28: #{tpu_custom_call.1} parent=11 // pred_fallthru
        _
    $region12: #{tpu_custom_call.1} parent=5 // pred_fallthru
      _
    %p174 = scmp.lt.s32.totalorder %s11, 2
    // Predicated region
    $region29: #{tpu_custom_call.1} parent=5 // pred_check
      %p175 = pneg %p174
    $region30: #{tpu_custom_call.1} parent=5 // pred_check_branch
      %177 = sbr.rel (%p175) target = $region32
    $region31: #{tpu_custom_call.1} parent=5 // pred_region
      // Predicated region
      $region33: #{tpu_custom_call.1} parent=31 // pred_check
        %p178 = pneg %p31
      $region34: #{tpu_custom_call.1} parent=31 // pred_check_branch
        %180 = sbr.rel (%p178) target = $region36
      $region35: #{tpu_custom_call.1} parent=31 // pred_region
        %p181 = scmp.lt.s32.totalorder %s11, 1
        %s182 = scalar_select %p181, %s11, 1
        %s183 = smul.addr %s182, 8
        %s184 = smul.addr %s183, 8
        %s185 = scalar_lea.vmem %s0, %s184
      $region36: #{tpu_custom_call.1} parent=31 // pred_fallthru
        _
    $region32: #{tpu_custom_call.1} parent=5 // pred_fallthru
      _
    %p186 = scmp.le.s32.totalorder 1, %s11
    %p187 = scmp.lt.s32.totalorder %s11, 3
    %p188 = pnand %p186, %p187
    %p189 = pneg %p188
    // Predicated region
    $region37: #{tpu_custom_call.1} parent=5 // pred_check
      _
    $region38: #{tpu_custom_call.1} parent=5 // pred_check_branch
      %191 = sbr.rel (%p188) target = $region40
    $region39: #{tpu_custom_call.1} parent=5 // pred_region
      %s192 = ssub.s32 %s11, 1
      %p193 = scmp.lt.s32.totalorder %s16, 1
      %s194 = scalar_select %p193, %s16, 1
      %s195 = smul.addr %s194, 8
      %s196 = smul.addr %s195, 8
      %s197 = scalar_lea.vmem %s0, %s196
      %p198 = pneg %p37
      %p199 = pneg %p34
      %p200 = pneg %p58
      %p201 = pneg %p55
      %p202 = pneg %p79
      %p203 = pneg %p76
      %p204 = pneg %p100
      %p205 = pneg %p97
      %p206 = pneg %p121
      %p207 = pneg %p118
      %p208 = pneg %p147
      %p209 = pneg %p144
      %p210 = scmp.lt.s32.totalorder %s16, 1
      %s211 = scalar_select %p210, %s16, 1
      %s212 = smul.addr %s211, 8
      %s213 = smul.addr %s212, 8
      %s214 = scalar_lea.vmem %s5, %s213
      %p215 = scmp.lt.s32.totalorder %s16, 1
      %s216 = scalar_select %p215, %s16, 1
      %s217 = smul.addr %s216, 8
      %s218 = smul.addr %s217, 8
      %s219 = scalar_lea.vmem %s0, %s218
      %p220 = scmp.lt.s32.totalorder %s16, 1
      %s221 = scalar_select %p220, %s16, 1
      %s222 = smul.addr %s221, 8
      %s223 = smul.addr %s222, 8
      %s224 = scalar_lea.vmem %s5, %s223
      %vm226 = vcmask 261120
      %227 = vst.msk [vmem:[#allocation2] sm:$0xff] %vm226, 0
      %228 = vst.msk [vmem:[#allocation2 + $0x28] sm:$0xff] %vm226, 0
      %v229 = vld [vmem:[%s219] sm:$0xff]
      %v230 = vld [vmem:[%s219 + $0x8] sm:$0xff]
      %v231 = vld [vmem:[%s219 + $0x10] sm:$0xff]
      %v232 = vld [vmem:[%s219 + $0x18] sm:$0xff]
      %v233 = vld [vmem:[%s219 + $0x20] sm:$0xff]
      %v234 = vld [vmem:[%s219 + $0x28] sm:$0xff]
      %v235 = vld [vmem:[%s219 + $0x30] sm:$0xff]
      %v236 = vld [vmem:[%s219 + $0x38] sm:$0xff]
      %vm237 = vcmp.gt.f32.partialorder %v229, 0.0
      %vm238 = vcmp.gt.f32.partialorder %v230, 0.0
      %vm239 = vcmp.gt.f32.partialorder %v231, 0.0
      %vm240 = vcmp.gt.f32.partialorder %v232, 0.0
      %vm241 = vcmp.gt.f32.partialorder %v233, 0.0
      %vm242 = vcmp.gt.f32.partialorder %v234, 0.0
      %vm243 = vcmp.gt.f32.partialorder %v235, 0.0
      %vm244 = vcmp.gt.f32.partialorder %v236, 0.0
      %v245 = vmul.f32 %v229, 0.1
      %v246 = vmul.f32 %v230, 0.1
      %v247 = vmul.f32 %v231, 0.1
      %v248 = vmul.f32 %v232, 0.1
      %v249 = vmul.f32 %v233, 0.1
      %v250 = vmul.f32 %v234, 0.1
      %v251 = vmul.f32 %v235, 0.1
      %v252 = vmul.f32 %v236, 0.1
      %v253 = vsel %vm237, %v229, %v245
      %v254 = vsel %vm238, %v230, %v246
      %v255 = vsel %vm239, %v231, %v247
      %v256 = vsel %vm240, %v232, %v248
      %v257 = vsel %vm241, %v233, %v249
      %v258 = vsel %vm242, %v234, %v250
      %v259 = vsel %vm243, %v235, %v251
      %v260 = vsel %vm244, %v236, %v252
      %v261 = vld [vmem:[%s1] sm:$0xf]
      %v262 = vld [vmem:[%s1 + $0x4] sm:$0xf]
      %v263 = vld [vmem:[%s1 + $0x8] sm:$0xf]
      %v264 = vld [vmem:[%s1 + $0xc] sm:$0xf]
      %v265 = vld [vmem:[%s1 + $0x10] sm:$0xf]
      %v266 = vld [vmem:[%s1 + $0x14] sm:$0xf]
      %v267 = vld [vmem:[%s1 + $0x18] sm:$0xf]
      %v268 = vld [vmem:[%s1 + $0x1c] sm:$0xf]
      %v269 = vld [vmem:[%s1 + $0x20] sm:$0xf]
      %v270 = vld [vmem:[%s1 + $0x24] sm:$0xf]
      %v271 = vld [vmem:[%s1 + $0x28] sm:$0xf]
      %v272 = vld [vmem:[%s1 + $0x2c] sm:$0xf]
      %v273 = vld [vmem:[%s2] sm:$0x1]
      %v274 = vpack.c.bf16 %v254, %v253
      %v275 = vpack.c.bf16 %v256, %v255
      %v276 = vpack.c.bf16 %v258, %v257
      %v277 = vpack.c.bf16 %v260, %v259
      %278 = vst.msk [vmem:[#allocation2 + $0x8] sm:$0xff] %vm226, %v274
      %279 = vst.msk [vmem:[#allocation2 + $0x10] sm:$0xff] %vm226, %v275
      %280 = vst.msk [vmem:[#allocation2 + $0x18] sm:$0xff] %vm226, %v276
      %281 = vst.msk [vmem:[#allocation2 + $0x20] sm:$0xff] %vm226, %v277
      %v282 = vld [vmem:[#allocation2] sm:$0x80]
      %v283 = vld [vmem:[#allocation2 + $0x8] sm:$0xff]
      %v284 = vld [vmem:[#allocation2 + $0x10] sm:$0xff]
      %v285 = vld [vmem:[#allocation2 + $0x18] sm:$0xff]
      %v286 = vld [vmem:[#allocation2 + $0x20] sm:$0xff]
      %vm287 = vsmask.f32 256
      %v289 = vshrl.u32 %v282, 16
      %v291 = vrot.slane %v289, 7
      %v293 = vshrl.u32 %v283, 16
      %v295 = vrot.slane %v293, 7
      %v296 = vshll.u32 %v283, 16
      %v298 = vor.u32 %v295, %v296
      %v299 = vsel %vm287, %v291, %v298
      %v301 = vshrl.u32 %v284, 16
      %v303 = vrot.slane %v301, 7
      %v304 = vshll.u32 %v284, 16
      %v306 = vor.u32 %v303, %v304
      %v307 = vsel %vm287, %v295, %v306
      %v309 = vshrl.u32 %v285, 16
      %v311 = vrot.slane %v309, 7
      %v312 = vshll.u32 %v285, 16
      %v314 = vor.u32 %v311, %v312
      %v315 = vsel %vm287, %v303, %v314
      %v317 = vshrl.u32 %v286, 16
      %v319 = vrot.slane %v317, 7
      %v320 = vshll.u32 %v286, 16
      %v322 = vor.u32 %v319, %v320
      %v323 = vsel %vm287, %v311, %v322
      %328 = vst.msk [vmem:[#allocation3] sm:$0xff] %vm226, %v299
      %329 = vst.msk [vmem:[#allocation3 + $0x8] sm:$0xff] %vm226, %v307
      %330 = vst.msk [vmem:[#allocation3 + $0x10] sm:$0xff] %vm226, %v315
      %331 = vst.msk [vmem:[#allocation3 + $0x18] sm:$0xff] %vm226, %v323
      %v332 = vld [vmem:[#allocation2 + $0x8] sm:$0xff]
      %v333 = vld [vmem:[#allocation2 + $0x10] sm:$0xff]
      %v334 = vld [vmem:[#allocation2 + $0x18] sm:$0xff]
      %v335 = vld [vmem:[#allocation2 + $0x20] sm:$0xff]
      %340 = vrot.lane.b32.xlu0 %v332, 32
      %v341 = vpop.permute.xlu0 %340
      %342 = vrot.lane.b32.xlu0 %v333, 32
      %v343 = vpop.permute.xlu0 %342
      %344 = vrot.lane.b32.xlu0 %v334, 32
      %v345 = vpop.permute.xlu0 %344
      %346 = vrot.lane.b32.xlu0 %v335, 32
      %v347 = vpop.permute.xlu0 %346
      %vm352 = vcmask 523520
      %353 = vst.msk [vmem:[#allocation3] sm:$0xff] %vm352, %v341
      %354 = vst.msk [vmem:[#allocation3 + $0x8] sm:$0xff] %vm352, %v343
      %355 = vst.msk [vmem:[#allocation3 + $0x10] sm:$0xff] %vm352, %v345
      %356 = vst.msk [vmem:[#allocation3 + $0x18] sm:$0xff] %vm352, %v347
      %v357 = vld [vmem:[#allocation2 + $0x8] sm:$0xff]
      %v358 = vld [vmem:[#allocation2 + $0x10] sm:$0xff]
      %v359 = vld [vmem:[#allocation2 + $0x18] sm:$0xff]
      %v360 = vld [vmem:[#allocation2 + $0x20] sm:$0xff]
      %v361 = vld [vmem:[#allocation2 + $0x28] sm:$0x1]
      %vm362 = vsmask.f32 7424
      %v364 = vshrl.u32 %v357, 16
      %v366 = vshll.u32 %v357, 16
      %v368 = vrot.slane %v366, 1
      %v369 = vor.u32 %v364, %v368
      %v371 = vshll.u32 %v358, 16
      %v373 = vrot.slane %v371, 1
      %v374 = vsel %vm362, %v369, %v373
      %v375 = vshrl.u32 %v358, 16
      %v377 = vor.u32 %v375, %v373
      %v379 = vshll.u32 %v359, 16
      %v381 = vrot.slane %v379, 1
      %v382 = vsel %vm362, %v377, %v381
      %v383 = vshrl.u32 %v359, 16
      %v385 = vor.u32 %v383, %v381
      %v387 = vshll.u32 %v360, 16
      %v389 = vrot.slane %v387, 1
      %v390 = vsel %vm362, %v385, %v389
      %v391 = vshrl.u32 %v360, 16
      %v393 = vor.u32 %v391, %v389
      %v395 = vshll.u32 %v361, 16
      %v397 = vrot.slane %v395, 1
      %v398 = vsel %vm362, %v393, %v397
      %399 = vrot.lane.b32.xlu0 %v374, 64
      %v400 = vpop.permute.xlu0 %399
      %401 = vrot.lane.b32.xlu0 %v382, 64
      %v402 = vpop.permute.xlu0 %401
      %403 = vrot.lane.b32.xlu0 %v390, 64
      %v404 = vpop.permute.xlu0 %403
      %405 = vrot.lane.b32.xlu0 %v398, 64
      %v406 = vpop.permute.xlu0 %405
      %vm411 = vcmask 785920
      %412 = vst.msk [vmem:[#allocation3] sm:$0xff] %vm411, %v400
      %413 = vst.msk [vmem:[#allocation3 + $0x8] sm:$0xff] %vm411, %v402
      %414 = vst.msk [vmem:[#allocation3 + $0x10] sm:$0xff] %vm411, %v404
      %415 = vst.msk [vmem:[#allocation3 + $0x18] sm:$0xff] %vm411, %v406
      %v416 = vld [vmem:[#allocation3] sm:$0xff]
      %v417 = vld [vmem:[#allocation3 + $0x8] sm:$0xff]
      %v418 = vld [vmem:[#allocation3 + $0x10] sm:$0xff]
      %v419 = vld [vmem:[#allocation3 + $0x18] sm:$0xff]
      %v421 = vlaneseq
      %v422 = vshrl.u32 %v421, 7
      %v423 = vsub.s32 0, %v422
      %v424 = vrot.slane %v273, %v423
      %v438 = vunpack.c.l.b16 %v261
      %v439 = vunpack.c.l.b16 %v262
      %v440 = vunpack.c.l.b16 %v263
      %v441 = vunpack.c.l.b16 %v264
      %v442 = vunpack.c.l.b16 %v265
      %v443 = vunpack.c.l.b16 %v266
      %v444 = vunpack.c.l.b16 %v267
      %v445 = vunpack.c.l.b16 %v268
      %v446 = vunpack.c.l.b16 %v269
      %v447 = vunpack.c.l.b16 %v270
      %v448 = vunpack.c.l.b16 %v271
      %v449 = vunpack.c.l.b16 %v272
      %v450 = vpack.c.b16 %v439, %v438
      %v451 = vpack.c.b16 %v441, %v440
      %v452 = vpack.c.b16 %v443, %v442
      %v453 = vpack.c.b16 %v445, %v444
      %v454 = vpack.c.b16 %v447, %v446
      %v455 = vpack.c.b16 %v449, %v448
      %vm462 = vcmask 785408
      %v464 = vsel %vm462, %v416, 0
      %v467 = vsel %vm462, %v417, 0
      %v470 = vsel %vm462, %v418, 0
      %v473 = vsel %vm462, %v419, 0
      %475 = vmatprep.subr.bf16.mxu0 0
      %476 = vmatpush1.bf16.msra.mxu0 %v450
      %477 = vmatprep.subr.bf16.mxu0 0
      %478 = vmatpush1.bf16.msra.mxu0 %v451
      %479 = vmatprep.subr.bf16.mxu0 0
      %480 = vmatpush1.bf16.msra.mxu0 %v452
      %481 = vmatprep.subr.bf16.mxu0 0
      %482 = vmatpush1.bf16.msra.mxu0 %v453
      %483 = vmatprep.subr.bf16.mxu0 0
      %484 = vmatpush1.bf16.msra.mxu0 %v454
      %485 = vmatprep.subr.bf16.mxu0 0
      %486 = vmatpush1.bf16.msra.mxu0 %v455
      %487 = vmatprep.subr.bf16.mxu0 0
      %488 = vmatpush1.bf16.msra.mxu0 0
      %489 = vmatprep.subr.bf16.mxu0 0
      %490 = vmatpush1.bf16.msra.mxu0 0
      %491 = vmatprep.subr.bf16.mxu0 0
      %492 = vmatpush1.bf16.msra.mxu0 0
      %493 = vmatprep.subr.bf16.mxu0 0
      %494 = vmatpush1.bf16.msra.mxu0 0
      %495 = vmatprep.subr.bf16.mxu0 0
      %496 = vmatpush1.bf16.msra.mxu0 0
      %497 = vmatprep.subr.bf16.mxu0 0
      %498 = vmatpush1.bf16.msra.mxu0 0
      %499 = vmatprep.subr.bf16.mxu0 0
      %500 = vmatpush1.bf16.msra.mxu0 0
      %501 = vmatprep.subr.bf16.mxu0 0
      %502 = vmatpush1.bf16.msra.mxu0 0
      %503 = vmatprep.subr.bf16.mxu0 0
      %504 = vmatpush1.bf16.msra.mxu0 0
      %505 = vmatprep.subr.bf16.mxu0 0
      %506 = vmatpush1.bf16.msra.mxu0 0
      %507 = vmatprep.mubr.bf16.mxu0 0
      %508 = vmatmul.mubr.bf16.gmra.mrb[0].mxu0 %v464
      %v509 = vpop.f32.mrb[0].mxu0
      %v510 = vadd.f32 %v424, %v509
      %v511 = vpop.f32.mrb[0].mxu0
      %v512 = vpop.f32.mrb[0].mxu0
      %v513 = vadd.f32 %v424, %v512
      %v514 = vpop.f32.mrb[0].mxu0
      %515 = vmatprep.mubr.bf16.mxu0 0
      %516 = vmatmul.mubr.bf16.gmra.mrb[0].mxu0 %v467
      %v517 = vpop.f32.mrb[0].mxu0
      %v518 = vadd.f32 %v424, %v517
      %v519 = vpop.f32.mrb[0].mxu0
      %v520 = vpop.f32.mrb[0].mxu0
      %v521 = vadd.f32 %v424, %v520
      %v522 = vpop.f32.mrb[0].mxu0
      %523 = vmatprep.mubr.bf16.mxu0 0
      %524 = vmatmul.mubr.bf16.gmra.mrb[0].mxu0 %v470
      %v525 = vpop.f32.mrb[0].mxu0
      %v526 = vadd.f32 %v424, %v525
      %v527 = vpop.f32.mrb[0].mxu0
      %v528 = vpop.f32.mrb[0].mxu0
      %v529 = vadd.f32 %v424, %v528
      %v530 = vpop.f32.mrb[0].mxu0
      %531 = vmatprep.mubr.bf16.mxu0 0
      %532 = vmatmul.mubr.bf16.gmra.mrb[0].mxu0 %v473
      %v533 = vpop.f32.mrb[0].mxu0
      %v534 = vadd.f32 %v424, %v533
      %v535 = vpop.f32.mrb[0].mxu0
      %v536 = vpop.f32.mrb[0].mxu0
      %v537 = vadd.f32 %v424, %v536
      %v538 = vpop.f32.mrb[0].mxu0
      %539 = vdwg.mxu0
      %vm540 = vcmp.gt.f32.partialorder %v510, 0.0
      %vm541 = vcmp.gt.f32.partialorder %v513, 0.0
      %vm542 = vcmp.gt.f32.partialorder %v518, 0.0
      %vm543 = vcmp.gt.f32.partialorder %v521, 0.0
      %vm544 = vcmp.gt.f32.partialorder %v526, 0.0
      %vm545 = vcmp.gt.f32.partialorder %v529, 0.0
      %vm546 = vcmp.gt.f32.partialorder %v534, 0.0
      %vm547 = vcmp.gt.f32.partialorder %v537, 0.0
      %v548 = vmul.f32 %v510, 0.1
      %v549 = vmul.f32 %v513, 0.1
      %v550 = vmul.f32 %v518, 0.1
      %v551 = vmul.f32 %v521, 0.1
      %v552 = vmul.f32 %v526, 0.1
      %v553 = vmul.f32 %v529, 0.1
      %v554 = vmul.f32 %v534, 0.1
      %v555 = vmul.f32 %v537, 0.1
      %v556 = vsel %vm540, %v510, %v548
      %v557 = vsel %vm541, %v513, %v549
      %v558 = vsel %vm542, %v518, %v550
      %v559 = vsel %vm543, %v521, %v551
      %v560 = vsel %vm544, %v526, %v552
      %v561 = vsel %vm545, %v529, %v553
      %v562 = vsel %vm546, %v534, %v554
      %v563 = vsel %vm547, %v537, %v555
      %v564 = vld [vmem:[%s3] sm:$0xf]
      %v565 = vld [vmem:[%s3 + $0x4] sm:$0xf]
      %v566 = vld [vmem:[%s3 + $0x8] sm:$0xf]
      %v567 = vld [vmem:[%s3 + $0xc] sm:$0xf]
      %v568 = vld [vmem:[%s3 + $0x10] sm:$0xf]
      %v569 = vld [vmem:[%s3 + $0x14] sm:$0xf]
      %v570 = vld [vmem:[%s3 + $0x18] sm:$0xf]
      %v571 = vld [vmem:[%s3 + $0x1c] sm:$0xf]
      %v572 = vld [vmem:[%s3 + $0x20] sm:$0xf]
      %v573 = vld [vmem:[%s3 + $0x24] sm:$0xf]
      %v574 = vld [vmem:[%s3 + $0x28] sm:$0xf]
      %v575 = vld [vmem:[%s3 + $0x2c] sm:$0xf]
      %v576 = vld [vmem:[%s4] sm:$0x1]
      %v577 = vpack.c.bf16 %v557, %v556
      %v578 = vpack.c.bf16 %v559, %v558
      %v579 = vpack.c.bf16 %v561, %v560
      %v580 = vpack.c.bf16 %v563, %v562
      %581 = vst.msk [vmem:[#allocation2 + $0x8] sm:$0xff] %vm226, %v577
      %582 = vst.msk [vmem:[#allocation2 + $0x10] sm:$0xff] %vm226, %v578
      %583 = vst.msk [vmem:[#allocation2 + $0x18] sm:$0xff] %vm226, %v579
      %584 = vst.msk [vmem:[#allocation2 + $0x20] sm:$0xff] %vm226, %v580
      %v585 = vld [vmem:[#allocation2] sm:$0x80]
      %v586 = vld [vmem:[#allocation2 + $0x8] sm:$0xff]
      %v587 = vld [vmem:[#allocation2 + $0x10] sm:$0xff]
      %v588 = vld [vmem:[#allocation2 + $0x18] sm:$0xff]
      %v589 = vld [vmem:[#allocation2 + $0x20] sm:$0xff]
      %v591 = vshrl.u32 %v585, 16
      %v593 = vrot.slane %v591, 7
      %v595 = vshrl.u32 %v586, 16
      %v597 = vrot.slane %v595, 7
      %v598 = vshll.u32 %v586, 16
      %v600 = vor.u32 %v597, %v598
      %v601 = vsel %vm287, %v593, %v600
      %v603 = vshrl.u32 %v587, 16
      %v605 = vrot.slane %v603, 7
      %v606 = vshll.u32 %v587, 16
      %v608 = vor.u32 %v605, %v606
      %v609 = vsel %vm287, %v597, %v608
      %v611 = vshrl.u32 %v588, 16
      %v613 = vrot.slane %v611, 7
      %v614 = vshll.u32 %v588, 16
      %v616 = vor.u32 %v613, %v614
      %v617 = vsel %vm287, %v605, %v616
      %v619 = vshrl.u32 %v589, 16
      %v621 = vrot.slane %v619, 7
      %v622 = vshll.u32 %v589, 16
      %v624 = vor.u32 %v621, %v622
      %v625 = vsel %vm287, %v613, %v624
      %630 = vst.msk [vmem:[#allocation3] sm:$0xff] %vm226, %v601
      %631 = vst.msk [vmem:[#allocation3 + $0x8] sm:$0xff] %vm226, %v609
      %632 = vst.msk [vmem:[#allocation3 + $0x10] sm:$0xff] %vm226, %v617
      %633 = vst.msk [vmem:[#allocation3 + $0x18] sm:$0xff] %vm226, %v625
      %v634 = vld [vmem:[#allocation2 + $0x8] sm:$0xff]
      %v635 = vld [vmem:[#allocation2 + $0x10] sm:$0xff]
      %v636 = vld [vmem:[#allocation2 + $0x18] sm:$0xff]
      %v637 = vld [vmem:[#allocation2 + $0x20] sm:$0xff]
      %642 = vrot.lane.b32.xlu0 %v634, 32
      %v643 = vpop.permute.xlu0 %642
      %644 = vrot.lane.b32.xlu0 %v635, 32
      %v645 = vpop.permute.xlu0 %644
      %646 = vrot.lane.b32.xlu0 %v636, 32
      %v647 = vpop.permute.xlu0 %646
      %648 = vrot.lane.b32.xlu0 %v637, 32
      %v649 = vpop.permute.xlu0 %648
      %654 = vst.msk [vmem:[#allocation3] sm:$0xff] %vm352, %v643
      %655 = vst.msk [vmem:[#allocation3 + $0x8] sm:$0xff] %vm352, %v645
      %656 = vst.msk [vmem:[#allocation3 + $0x10] sm:$0xff] %vm352, %v647
      %657 = vst.msk [vmem:[#allocation3 + $0x18] sm:$0xff] %vm352, %v649
      %v658 = vld [vmem:[#allocation2 + $0x8] sm:$0xff]
      %v659 = vld [vmem:[#allocation2 + $0x10] sm:$0xff]
      %v660 = vld [vmem:[#allocation2 + $0x18] sm:$0xff]
      %v661 = vld [vmem:[#allocation2 + $0x20] sm:$0xff]
      %v662 = vld [vmem:[#allocation2 + $0x28] sm:$0x1]
      %v664 = vshrl.u32 %v658, 16
      %v666 = vshll.u32 %v658, 16
      %v668 = vrot.slane %v666, 1
      %v669 = vor.u32 %v664, %v668
      %v671 = vshll.u32 %v659, 16
      %v673 = vrot.slane %v671, 1
      %v674 = vsel %vm362, %v669, %v673
      %v675 = vshrl.u32 %v659, 16
      %v677 = vor.u32 %v675, %v673
      %v679 = vshll.u32 %v660, 16
      %v681 = vrot.slane %v679, 1
      %v682 = vsel %vm362, %v677, %v681
      %v683 = vshrl.u32 %v660, 16
      %v685 = vor.u32 %v683, %v681
      %v687 = vshll.u32 %v661, 16
      %v689 = vrot.slane %v687, 1
      %v690 = vsel %vm362, %v685, %v689
      %v691 = vshrl.u32 %v661, 16
      %v693 = vor.u32 %v691, %v689
      %v695 = vshll.u32 %v662, 16
      %v697 = vrot.slane %v695, 1
      %v698 = vsel %vm362, %v693, %v697
      %699 = vrot.lane.b32.xlu0 %v674, 64
      %v700 = vpop.permute.xlu0 %699
      %701 = vrot.lane.b32.xlu0 %v682, 64
      %v702 = vpop.permute.xlu0 %701
      %703 = vrot.lane.b32.xlu0 %v690, 64
      %v704 = vpop.permute.xlu0 %703
      %705 = vrot.lane.b32.xlu0 %v698, 64
      %v706 = vpop.permute.xlu0 %705
      %711 = vst.msk [vmem:[#allocation3] sm:$0xff] %vm411, %v700
      %712 = vst.msk [vmem:[#allocation3 + $0x8] sm:$0xff] %vm411, %v702
      %713 = vst.msk [vmem:[#allocation3 + $0x10] sm:$0xff] %vm411, %v704
      %714 = vst.msk [vmem:[#allocation3 + $0x18] sm:$0xff] %vm411, %v706
      %v715 = vld [vmem:[#allocation3] sm:$0xff]
      %v716 = vld [vmem:[#allocation3 + $0x8] sm:$0xff]
      %v717 = vld [vmem:[#allocation3 + $0x10] sm:$0xff]
      %v718 = vld [vmem:[#allocation3 + $0x18] sm:$0xff]
      %v720 = vlaneseq
      %v721 = vshrl.u32 %v720, 7
      %v722 = vsub.s32 0, %v721
      %v723 = vrot.slane %v576, %v722
      %v737 = vunpack.c.l.b16 %v564
      %v738 = vunpack.c.l.b16 %v565
      %v739 = vunpack.c.l.b16 %v566
      %v740 = vunpack.c.l.b16 %v567
      %v741 = vunpack.c.l.b16 %v568
      %v742 = vunpack.c.l.b16 %v569
      %v743 = vunpack.c.l.b16 %v570
      %v744 = vunpack.c.l.b16 %v571
      %v745 = vunpack.c.l.b16 %v572
      %v746 = vunpack.c.l.b16 %v573
      %v747 = vunpack.c.l.b16 %v574
      %v748 = vunpack.c.l.b16 %v575
      %v749 = vpack.c.b16 %v738, %v737
      %v750 = vpack.c.b16 %v740, %v739
      %v751 = vpack.c.b16 %v742, %v741
      %v752 = vpack.c.b16 %v744, %v743
      %v753 = vpack.c.b16 %v746, %v745
      %v754 = vpack.c.b16 %v748, %v747
      %v762 = vsel %vm462, %v715, 0
      %v765 = vsel %vm462, %v716, 0
      %v768 = vsel %vm462, %v717, 0
      %v771 = vsel %vm462, %v718, 0
      %773 = vmatprep.subr.bf16.mxu0 0
      %774 = vmatpush1.bf16.msra.mxu0 %v749
      %775 = vmatprep.subr.bf16.mxu0 0
      %776 = vmatpush1.bf16.msra.mxu0 %v750
      %777 = vmatprep.subr.bf16.mxu0 0
      %778 = vmatpush1.bf16.msra.mxu0 %v751
      %779 = vmatprep.subr.bf16.mxu0 0
      %780 = vmatpush1.bf16.msra.mxu0 %v752
      %781 = vmatprep.subr.bf16.mxu0 0
      %782 = vmatpush1.bf16.msra.mxu0 %v753
      %783 = vmatprep.subr.bf16.mxu0 0
      %784 = vmatpush1.bf16.msra.mxu0 %v754
      %785 = vmatprep.subr.bf16.mxu0 0
      %786 = vmatpush1.bf16.msra.mxu0 0
      %787 = vmatprep.subr.bf16.mxu0 0
      %788 = vmatpush1.bf16.msra.mxu0 0
      %789 = vmatprep.subr.bf16.mxu0 0
      %790 = vmatpush1.bf16.msra.mxu0 0
      %791 = vmatprep.subr.bf16.mxu0 0
      %792 = vmatpush1.bf16.msra.mxu0 0
      %793 = vmatprep.subr.bf16.mxu0 0
      %794 = vmatpush1.bf16.msra.mxu0 0
      %795 = vmatprep.subr.bf16.mxu0 0
      %796 = vmatpush1.bf16.msra.mxu0 0
      %797 = vmatprep.subr.bf16.mxu0 0
      %798 = vmatpush1.bf16.msra.mxu0 0
      %799 = vmatprep.subr.bf16.mxu0 0
      %800 = vmatpush1.bf16.msra.mxu0 0
      %801 = vmatprep.subr.bf16.mxu0 0
      %802 = vmatpush1.bf16.msra.mxu0 0
      %803 = vmatprep.subr.bf16.mxu0 0
      %804 = vmatpush1.bf16.msra.mxu0 0
      %805 = vmatprep.mubr.bf16.mxu0 0
      %806 = vmatmul.mubr.bf16.gmra.mrb[0].mxu0 %v762
      %v807 = vpop.f32.mrb[0].mxu0
      %v808 = vadd.f32 %v723, %v807
      %v809 = vpop.f32.mrb[0].mxu0
      %v810 = vpop.f32.mrb[0].mxu0
      %v811 = vadd.f32 %v723, %v810
      %v812 = vpop.f32.mrb[0].mxu0
      %813 = vmatprep.mubr.bf16.mxu0 0
      %814 = vmatmul.mubr.bf16.gmra.mrb[0].mxu0 %v765
      %v815 = vpop.f32.mrb[0].mxu0
      %v816 = vadd.f32 %v723, %v815
      %v817 = vpop.f32.mrb[0].mxu0
      %v818 = vpop.f32.mrb[0].mxu0
      %v819 = vadd.f32 %v723, %v818
      %v820 = vpop.f32.mrb[0].mxu0
      %821 = vmatprep.mubr.bf16.mxu0 0
      %822 = vmatmul.mubr.bf16.gmra.mrb[0].mxu0 %v768
      %v823 = vpop.f32.mrb[0].mxu0
      %v824 = vadd.f32 %v723, %v823
      %v825 = vpop.f32.mrb[0].mxu0
      %v826 = vpop.f32.mrb[0].mxu0
      %v827 = vadd.f32 %v723, %v826
      %v828 = vpop.f32.mrb[0].mxu0
      %829 = vmatprep.mubr.bf16.mxu0 0
      %830 = vmatmul.mubr.bf16.gmra.mrb[0].mxu0 %v771
      %v831 = vpop.f32.mrb[0].mxu0
      %v832 = vadd.f32 %v723, %v831
      %v833 = vpop.f32.mrb[0].mxu0
      %v834 = vpop.f32.mrb[0].mxu0
      %v835 = vadd.f32 %v723, %v834
      %v836 = vpop.f32.mrb[0].mxu0
      %837 = vdwg.mxu0
      %v838 = vadd.f32 %v808, %v229
      %v839 = vadd.f32 %v811, %v230
      %v840 = vadd.f32 %v816, %v231
      %v841 = vadd.f32 %v819, %v232
      %v842 = vadd.f32 %v824, %v233
      %v843 = vadd.f32 %v827, %v234
      %v844 = vadd.f32 %v832, %v235
      %v845 = vadd.f32 %v835, %v236
      %vm846 = vcmp.gt.f32.partialorder %v838, 0.0
      %vm847 = vcmp.gt.f32.partialorder %v839, 0.0
      %vm848 = vcmp.gt.f32.partialorder %v840, 0.0
      %vm849 = vcmp.gt.f32.partialorder %v841, 0.0
      %vm850 = vcmp.gt.f32.partialorder %v842, 0.0
      %vm851 = vcmp.gt.f32.partialorder %v843, 0.0
      %vm852 = vcmp.gt.f32.partialorder %v844, 0.0
      %vm853 = vcmp.gt.f32.partialorder %v845, 0.0
      %v854 = vmul.f32 %v838, 0.1
      %v855 = vmul.f32 %v839, 0.1
      %v856 = vmul.f32 %v840, 0.1
      %v857 = vmul.f32 %v841, 0.1
      %v858 = vmul.f32 %v842, 0.1
      %v859 = vmul.f32 %v843, 0.1
      %v860 = vmul.f32 %v844, 0.1
      %v861 = vmul.f32 %v845, 0.1
      %v862 = vsel %vm846, %v838, %v854
      %v863 = vsel %vm847, %v839, %v855
      %v864 = vsel %vm848, %v840, %v856
      %v865 = vsel %vm849, %v841, %v857
      %v866 = vsel %vm850, %v842, %v858
      %v867 = vsel %vm851, %v843, %v859
      %v868 = vsel %vm852, %v844, %v860
      %v869 = vsel %vm853, %v845, %v861
      %s870 = scalar_lea.vmem %s1, 48
      %v871 = vld [vmem:[%s870] sm:$0xf]
      %v872 = vld [vmem:[%s870 + $0x4] sm:$0xf]
      %v873 = vld [vmem:[%s870 + $0x8] sm:$0xf]
      %v874 = vld [vmem:[%s870 + $0xc] sm:$0xf]
      %v875 = vld [vmem:[%s870 + $0x10] sm:$0xf]
      %v876 = vld [vmem:[%s870 + $0x14] sm:$0xf]
      %v877 = vld [vmem:[%s870 + $0x18] sm:$0xf]
      %v878 = vld [vmem:[%s870 + $0x1c] sm:$0xf]
      %v879 = vld [vmem:[%s870 + $0x20] sm:$0xf]
      %v880 = vld [vmem:[%s870 + $0x24] sm:$0xf]
      %v881 = vld [vmem:[%s870 + $0x28] sm:$0xf]
      %v882 = vld [vmem:[%s870 + $0x2c] sm:$0xf]
      %s883 = scalar_lea.vmem %s2, 1
      %v884 = vld [vmem:[%s883] sm:$0x1]
      %v885 = vpack.c.bf16 %v863, %v862
      %v886 = vpack.c.bf16 %v865, %v864
      %v887 = vpack.c.bf16 %v867, %v866
      %v888 = vpack.c.bf16 %v869, %v868
      %889 = vst.msk [vmem:[#allocation2 + $0x8] sm:$0xff] %vm226, %v885
      %890 = vst.msk [vmem:[#allocation2 + $0x10] sm:$0xff] %vm226, %v886
      %891 = vst.msk [vmem:[#allocation2 + $0x18] sm:$0xff] %vm226, %v887
      %892 = vst.msk [vmem:[#allocation2 + $0x20] sm:$0xff] %vm226, %v888
      %v893 = vld [vmem:[#allocation2] sm:$0xc0]
      %v894 = vld [vmem:[#allocation2 + $0x8] sm:$0xff]
      %v895 = vld [vmem:[#allocation2 + $0x10] sm:$0xff]
      %v896 = vld [vmem:[#allocation2 + $0x18] sm:$0xff]
      %v897 = vld [vmem:[#allocation2 + $0x20] sm:$0x7f]
      %vm898 = vsmask.f32 1280
      %v900 = vshrl.u32 %v893, 16
      %v902 = vrot.slane %v900, 6
      %v903 = vshll.u32 %v893, 16
      %v905 = vrot.slane %v903, 7
      %v906 = vor.u32 %v902, %v905
      %v908 = vshrl.u32 %v894, 16
      %v910 = vrot.slane %v908, 6
      %v911 = vshll.u32 %v894, 16
      %v913 = vrot.slane %v911, 7
      %v914 = vor.u32 %v910, %v913
      %v915 = vsel %vm898, %v906, %v914
      %v917 = vshrl.u32 %v895, 16
      %v919 = vrot.slane %v917, 6
      %v920 = vshll.u32 %v895, 16
      %v922 = vrot.slane %v920, 7
      %v923 = vor.u32 %v919, %v922
      %v924 = vsel %vm898, %v914, %v923
      %v926 = vshrl.u32 %v896, 16
      %v928 = vrot.slane %v926, 6
      %v929 = vshll.u32 %v896, 16
      %v931 = vrot.slane %v929, 7
      %v932 = vor.u32 %v928, %v931
      %v933 = vsel %vm898, %v923, %v932
      %v935 = vshrl.u32 %v897, 16
      %v937 = vrot.slane %v935, 6
      %v938 = vshll.u32 %v897, 16
      %v940 = vrot.slane %v938, 7
      %v941 = vor.u32 %v937, %v940
      %v942 = vsel %vm898, %v932, %v941
      %947 = vst.msk [vmem:[#allocation3] sm:$0xff] %vm226, %v915
      %948 = vst.msk [vmem:[#allocation3 + $0x8] sm:$0xff] %vm226, %v924
      %949 = vst.msk [vmem:[#allocation3 + $0x10] sm:$0xff] %vm226, %v933
      %950 = vst.msk [vmem:[#allocation3 + $0x18] sm:$0xff] %vm226, %v942
      %v951 = vld [vmem:[#allocation2 + $0x8] sm:$0xff]
      %v952 = vld [vmem:[#allocation2 + $0x10] sm:$0xff]
      %v953 = vld [vmem:[#allocation2 + $0x18] sm:$0xff]
      %v954 = vld [vmem:[#allocation2 + $0x20] sm:$0xff]
      %959 = vrot.lane.b32.xlu0 %v951, 32
      %v960 = vpop.permute.xlu0 %959
      %961 = vrot.lane.b32.xlu0 %v952, 32
      %v962 = vpop.permute.xlu0 %961
      %963 = vrot.lane.b32.xlu0 %v953, 32
      %v964 = vpop.permute.xlu0 %963
      %965 = vrot.lane.b32.xlu0 %v954, 32
      %v966 = vpop.permute.xlu0 %965
      %971 = vst.msk [vmem:[#allocation3] sm:$0xff] %vm352, %v960
      %972 = vst.msk [vmem:[#allocation3 + $0x8] sm:$0xff] %vm352, %v962
      %973 = vst.msk [vmem:[#allocation3 + $0x10] sm:$0xff] %vm352, %v964
      %974 = vst.msk [vmem:[#allocation3 + $0x18] sm:$0xff] %vm352, %v966
      %v975 = vld [vmem:[#allocation2 + $0x8] sm:$0xfe]
      %v976 = vld [vmem:[#allocation2 + $0x10] sm:$0xff]
      %v977 = vld [vmem:[#allocation2 + $0x18] sm:$0xff]
      %v978 = vld [vmem:[#allocation2 + $0x20] sm:$0xff]
      %v979 = vld [vmem:[#allocation2 + $0x28] sm:$0x3]
      %vm980 = vsmask.f32 6400
      %v982 = vshrl.u32 %v975, 16
      %v984 = vrot.slane %v982, 1
      %v985 = vshll.u32 %v975, 16
      %v987 = vrot.slane %v985, 2
      %v988 = vor.u32 %v984, %v987
      %v990 = vshrl.u32 %v976, 16
      %v992 = vrot.slane %v990, 1
      %v993 = vshll.u32 %v976, 16
      %v995 = vrot.slane %v993, 2
      %v996 = vor.u32 %v992, %v995
      %v997 = vsel %vm980, %v988, %v996
      %v999 = vshrl.u32 %v977, 16
      %v1001 = vrot.slane %v999, 1
      %v1002 = vshll.u32 %v977, 16
      %v1004 = vrot.slane %v1002, 2
      %v1005 = vor.u32 %v1001, %v1004
      %v1006 = vsel %vm980, %v996, %v1005
      %v1008 = vshrl.u32 %v978, 16
      %v1010 = vrot.slane %v1008, 1
      %v1011 = vshll.u32 %v978, 16
      %v1013 = vrot.slane %v1011, 2
      %v1014 = vor.u32 %v1010, %v1013
      %v1015 = vsel %vm980, %v1005, %v1014
      %v1017 = vshrl.u32 %v979, 16
      %v1019 = vrot.slane %v1017, 1
      %v1020 = vshll.u32 %v979, 16
      %v1022 = vrot.slane %v1020, 2
      %v1023 = vor.u32 %v1019, %v1022
      %v1024 = vsel %vm980, %v1014, %v1023
      %1025 = vrot.lane.b32.xlu0 %v997, 64
      %v1026 = vpop.permute.xlu0 %1025
      %1027 = vrot.lane.b32.xlu0 %v1006, 64
      %v1028 = vpop.permute.xlu0 %1027
      %1029 = vrot.lane.b32.xlu0 %v1015, 64
      %v1030 = vpop.permute.xlu0 %1029
      %1031 = vrot.lane.b32.xlu0 %v1024, 64
      %v1032 = vpop.permute.xlu0 %1031
      %1037 = vst.msk [vmem:[#allocation3] sm:$0xff] %vm411, %v1026
      %1038 = vst.msk [vmem:[#allocation3 + $0x8] sm:$0xff] %vm411, %v1028
      %1039 = vst.msk [vmem:[#allocation3 + $0x10] sm:$0xff] %vm411, %v1030
      %1040 = vst.msk [vmem:[#allocation3 + $0x18] sm:$0xff] %vm411, %v1032
      %v1041 = vld [vmem:[#allocation3] sm:$0xff]
      %v1042 = vld [vmem:[#allocation3 + $0x8] sm:$0xff]
      %v1043 = vld [vmem:[#allocation3 + $0x10] sm:$0xff]
      %v1044 = vld [vmem:[#allocation3 + $0x18] sm:$0xff]
      %v1046 = vlaneseq
      %v1047 = vshrl.u32 %v1046, 7
      %v1048 = vsub.s32 0, %v1047
      %v1049 = vrot.slane %v884, %v1048
      %v1063 = vunpack.c.l.b16 %v871
      %v1064 = vunpack.c.l.b16 %v872
      %v1065 = vunpack.c.l.b16 %v873
      %v1066 = vunpack.c.l.b16 %v874
      %v1067 = vunpack.c.l.b16 %v875
      %v1068 = vunpack.c.l.b16 %v876
      %v1069 = vunpack.c.l.b16 %v877
      %v1070 = vunpack.c.l.b16 %v878
      %v1071 = vunpack.c.l.b16 %v879
      %v1072 = vunpack.c.l.b16 %v880
      %v1073 = vunpack.c.l.b16 %v881
      %v1074 = vunpack.c.l.b16 %v882
      %v1075 = vpack.c.b16 %v1064, %v1063
      %v1076 = vpack.c.b16 %v1066, %v1065
      %v1077 = vpack.c.b16 %v1068, %v1067
      %v1078 = vpack.c.b16 %v1070, %v1069
      %v1079 = vpack.c.b16 %v1072, %v1071
      %v1080 = vpack.c.b16 %v1074, %v1073
      %v1088 = vsel %vm462, %v1041, 0
      %v1091 = vsel %vm462, %v1042, 0
      %v1094 = vsel %vm462, %v1043, 0
      %v1097 = vsel %vm462, %v1044, 0
      %1099 = vmatprep.subr.bf16.mxu0 0
      %1100 = vmatpush1.bf16.msra.mxu0 %v1075
      %1101 = vmatprep.subr.bf16.mxu0 0
      %1102 = vmatpush1.bf16.msra.mxu0 %v1076
      %1103 = vmatprep.subr.bf16.mxu0 0
      %1104 = vmatpush1.bf16.msra.mxu0 %v1077
      %1105 = vmatprep.subr.bf16.mxu0 0
      %1106 = vmatpush1.bf16.msra.mxu0 %v1078
      %1107 = vmatprep.subr.bf16.mxu0 0
      %1108 = vmatpush1.bf16.msra.mxu0 %v1079
      %1109 = vmatprep.subr.bf16.mxu0 0
      %1110 = vmatpush1.bf16.msra.mxu0 %v1080
      %1111 = vmatprep.subr.bf16.mxu0 0
      %1112 = vmatpush1.bf16.msra.mxu0 0
      %1113 = vmatprep.subr.bf16.mxu0 0
      %1114 = vmatpush1.bf16.msra.mxu0 0
      %1115 = vmatprep.subr.bf16.mxu0 0
      %1116 = vmatpush1.bf16.msra.mxu0 0
      %1117 = vmatprep.subr.bf16.mxu0 0
      %1118 = vmatpush1.bf16.msra.mxu0 0
      %1119 = vmatprep.subr.bf16.mxu0 0
      %1120 = vmatpush1.bf16.msra.mxu0 0
      %1121 = vmatprep.subr.bf16.mxu0 0
      %1122 = vmatpush1.bf16.msra.mxu0 0
      %1123 = vmatprep.subr.bf16.mxu0 0
      %1124 = vmatpush1.bf16.msra.mxu0 0
      %1125 = vmatprep.subr.bf16.mxu0 0
      %1126 = vmatpush1.bf16.msra.mxu0 0
      %1127 = vmatprep.subr.bf16.mxu0 0
      %1128 = vmatpush1.bf16.msra.mxu0 0
      %1129 = vmatprep.subr.bf16.mxu0 0
      %1130 = vmatpush1.bf16.msra.mxu0 0
      %1131 = vmatprep.mubr.bf16.mxu0 0
      %1132 = vmatmul.mubr.bf16.gmra.mrb[0].mxu0 %v1088
      %v1133 = vpop.f32.mrb[0].mxu0
      %v1134 = vadd.f32 %v1049, %v1133
      %v1135 = vpop.f32.mrb[0].mxu0
      %v1136 = vpop.f32.mrb[0].mxu0
      %v1137 = vadd.f32 %v1049, %v1136
      %v1138 = vpop.f32.mrb[0].mxu0
      %1139 = vmatprep.mubr.bf16.mxu0 0
      %1140 = vmatmul.mubr.bf16.gmra.mrb[0].mxu0 %v1091
      %v1141 = vpop.f32.mrb[0].mxu0
      %v1142 = vadd.f32 %v1049, %v1141
      %v1143 = vpop.f32.mrb[0].mxu0
      %v1144 = vpop.f32.mrb[0].mxu0
      %v1145 = vadd.f32 %v1049, %v1144
      %v1146 = vpop.f32.mrb[0].mxu0
      %1147 = vmatprep.mubr.bf16.mxu0 0
      %1148 = vmatmul.mubr.bf16.gmra.mrb[0].mxu0 %v1094
      %v1149 = vpop.f32.mrb[0].mxu0
      %v1150 = vadd.f32 %v1049, %v1149
      %v1151 = vpop.f32.mrb[0].mxu0
      %v1152 = vpop.f32.mrb[0].mxu0
      %v1153 = vadd.f32 %v1049, %v1152
      %v1154 = vpop.f32.mrb[0].mxu0
      %1155 = vmatprep.mubr.bf16.mxu0 0
      %1156 = vmatmul.mubr.bf16.gmra.mrb[0].mxu0 %v1097
      %v1157 = vpop.f32.mrb[0].mxu0
      %v1158 = vadd.f32 %v1049, %v1157
      %v1159 = vpop.f32.mrb[0].mxu0
      %v1160 = vpop.f32.mrb[0].mxu0
      %v1161 = vadd.f32 %v1049, %v1160
      %v1162 = vpop.f32.mrb[0].mxu0
      %1163 = vdwg.mxu0
      %vm1164 = vcmp.gt.f32.partialorder %v1134, 0.0
      %vm1165 = vcmp.gt.f32.partialorder %v1137, 0.0
      %vm1166 = vcmp.gt.f32.partialorder %v1142, 0.0
      %vm1167 = vcmp.gt.f32.partialorder %v1145, 0.0
      %vm1168 = vcmp.gt.f32.partialorder %v1150, 0.0
      %vm1169 = vcmp.gt.f32.partialorder %v1153, 0.0
      %vm1170 = vcmp.gt.f32.partialorder %v1158, 0.0
      %vm1171 = vcmp.gt.f32.partialorder %v1161, 0.0
      %v1172 = vmul.f32 %v1134, 0.1
      %v1173 = vmul.f32 %v1137, 0.1
      %v1174 = vmul.f32 %v1142, 0.1
      %v1175 = vmul.f32 %v1145, 0.1
      %v1176 = vmul.f32 %v1150, 0.1
      %v1177 = vmul.f32 %v1153, 0.1
      %v1178 = vmul.f32 %v1158, 0.1
      %v1179 = vmul.f32 %v1161, 0.1
      %v1180 = vsel %vm1164, %v1134, %v1172
      %v1181 = vsel %vm1165, %v1137, %v1173
      %v1182 = vsel %vm1166, %v1142, %v1174
      %v1183 = vsel %vm1167, %v1145, %v1175
      %v1184 = vsel %vm1168, %v1150, %v1176
      %v1185 = vsel %vm1169, %v1153, %v1177
      %v1186 = vsel %vm1170, %v1158, %v1178
      %v1187 = vsel %vm1171, %v1161, %v1179
      %s1188 = scalar_lea.vmem %s3, 48
      %v1189 = vld [vmem:[%s1188] sm:$0xf]
      %v1190 = vld [vmem:[%s1188 + $0x4] sm:$0xf]
      %v1191 = vld [vmem:[%s1188 + $0x8] sm:$0xf]
      %v1192 = vld [vmem:[%s1188 + $0xc] sm:$0xf]
      %v1193 = vld [vmem:[%s1188 + $0x10] sm:$0xf]
      %v1194 = vld [vmem:[%s1188 + $0x14] sm:$0xf]
      %v1195 = vld [vmem:[%s1188 + $0x18] sm:$0xf]
      %v1196 = vld [vmem:[%s1188 + $0x1c] sm:$0xf]
      %v1197 = vld [vmem:[%s1188 + $0x20] sm:$0xf]
      %v1198 = vld [vmem:[%s1188 + $0x24] sm:$0xf]
      %v1199 = vld [vmem:[%s1188 + $0x28] sm:$0xf]
      %v1200 = vld [vmem:[%s1188 + $0x2c] sm:$0xf]
      %s1201 = scalar_lea.vmem %s4, 1
      %v1202 = vld [vmem:[%s1201] sm:$0x1]
      %v1203 = vpack.c.bf16 %v1181, %v1180
      %v1204 = vpack.c.bf16 %v1183, %v1182
      %v1205 = vpack.c.bf16 %v1185, %v1184
      %v1206 = vpack.c.bf16 %v1187, %v1186
      %1207 = vst.msk [vmem:[#allocation2 + $0x8] sm:$0xff] %vm226, %v1203
      %1208 = vst.msk [vmem:[#allocation2 + $0x10] sm:$0xff] %vm226, %v1204
      %1209 = vst.msk [vmem:[#allocation2 + $0x18] sm:$0xff] %vm226, %v1205
      %1210 = vst.msk [vmem:[#allocation2 + $0x20] sm:$0xff] %vm226, %v1206
      %v1211 = vld [vmem:[#allocation2] sm:$0x80]
      %v1212 = vld [vmem:[#allocation2 + $0x8] sm:$0xff]
      %v1213 = vld [vmem:[#allocation2 + $0x10] sm:$0xff]
      %v1214 = vld [vmem:[#allocation2 + $0x18] sm:$0xff]
      %v1215 = vld [vmem:[#allocation2 + $0x20] sm:$0xff]
      %v1217 = vshrl.u32 %v1211, 16
      %v1219 = vrot.slane %v1217, 7
      %v1221 = vshrl.u32 %v1212, 16
      %v1223 = vrot.slane %v1221, 7
      %v1224 = vshll.u32 %v1212, 16
      %v1226 = vor.u32 %v1223, %v1224
      %v1227 = vsel %vm287, %v1219, %v1226
      %v1229 = vshrl.u32 %v1213, 16
      %v1231 = vrot.slane %v1229, 7
      %v1232 = vshll.u32 %v1213, 16
      %v1234 = vor.u32 %v1231, %v1232
      %v1235 = vsel %vm287, %v1223, %v1234
      %v1237 = vshrl.u32 %v1214, 16
      %v1239 = vrot.slane %v1237, 7
      %v1240 = vshll.u32 %v1214, 16
      %v1242 = vor.u32 %v1239, %v1240
      %v1243 = vsel %vm287, %v1231, %v1242
      %v1245 = vshrl.u32 %v1215, 16
      %v1247 = vrot.slane %v1245, 7
      %v1248 = vshll.u32 %v1215, 16
      %v1250 = vor.u32 %v1247, %v1248
      %v1251 = vsel %vm287, %v1239, %v1250
      %1256 = vst.msk [vmem:[#allocation3] sm:$0xff] %vm226, %v1227
      %1257 = vst.msk [vmem:[#allocation3 + $0x8] sm:$0xff] %vm226, %v1235
      %1258 = vst.msk [vmem:[#allocation3 + $0x10] sm:$0xff] %vm226, %v1243
      %1259 = vst.msk [vmem:[#allocation3 + $0x18] sm:$0xff] %vm226, %v1251
      %v1260 = vld [vmem:[#allocation2 + $0x8] sm:$0xff]
      %v1261 = vld [vmem:[#allocation2 + $0x10] sm:$0xff]
      %v1262 = vld [vmem:[#allocation2 + $0x18] sm:$0xff]
      %v1263 = vld [vmem:[#allocation2 + $0x20] sm:$0xff]
      %1268 = vrot.lane.b32.xlu0 %v1260, 32
      %v1269 = vpop.permute.xlu0 %1268
      %1270 = vrot.lane.b32.xlu0 %v1261, 32
      %v1271 = vpop.permute.xlu0 %1270
      %1272 = vrot.lane.b32.xlu0 %v1262, 32
      %v1273 = vpop.permute.xlu0 %1272
      %1274 = vrot.lane.b32.xlu0 %v1263, 32
      %v1275 = vpop.permute.xlu0 %1274
      %1280 = vst.msk [vmem:[#allocation3] sm:$0xff] %vm352, %v1269
      %1281 = vst.msk [vmem:[#allocation3 + $0x8] sm:$0xff] %vm352, %v1271
      %1282 = vst.msk [vmem:[#allocation3 + $0x10] sm:$0xff] %vm352, %v1273
      %1283 = vst.msk [vmem:[#allocation3 + $0x18] sm:$0xff] %vm352, %v1275
      %v1284 = vld [vmem:[#allocation2 + $0x8] sm:$0xff]
      %v1285 = vld [vmem:[#allocation2 + $0x10] sm:$0xff]
      %v1286 = vld [vmem:[#allocation2 + $0x18] sm:$0xff]
      %v1287 = vld [vmem:[#allocation2 + $0x20] sm:$0xff]
      %v1288 = vld [vmem:[#allocation2 + $0x28] sm:$0x1]
      %v1290 = vshrl.u32 %v1284, 16
      %v1292 = vshll.u32 %v1284, 16
      %v1294 = vrot.slane %v1292, 1
      %v1295 = vor.u32 %v1290, %v1294
      %v1297 = vshll.u32 %v1285, 16
      %v1299 = vrot.slane %v1297, 1
      %v1300 = vsel %vm362, %v1295, %v1299
      %v1301 = vshrl.u32 %v1285, 16
      %v1303 = vor.u32 %v1301, %v1299
      %v1305 = vshll.u32 %v1286, 16
      %v1307 = vrot.slane %v1305, 1
      %v1308 = vsel %vm362, %v1303, %v1307
      %v1309 = vshrl.u32 %v1286, 16
      %v1311 = vor.u32 %v1309, %v1307
      %v1313 = vshll.u32 %v1287, 16
      %v1315 = vrot.slane %v1313, 1
      %v1316 = vsel %vm362, %v1311, %v1315
      %v1317 = vshrl.u32 %v1287, 16
      %v1319 = vor.u32 %v1317, %v1315
      %v1321 = vshll.u32 %v1288, 16
      %v1323 = vrot.slane %v1321, 1
      %v1324 = vsel %vm362, %v1319, %v1323
      %1325 = vrot.lane.b32.xlu0 %v1300, 64
      %v1326 = vpop.permute.xlu0 %1325
      %1327 = vrot.lane.b32.xlu0 %v1308, 64
      %v1328 = vpop.permute.xlu0 %1327
      %1329 = vrot.lane.b32.xlu0 %v1316, 64
      %v1330 = vpop.permute.xlu0 %1329
      %1331 = vrot.lane.b32.xlu0 %v1324, 64
      %v1332 = vpop.permute.xlu0 %1331
      %1337 = vst.msk [vmem:[#allocation3] sm:$0xff] %vm411, %v1326
      %1338 = vst.msk [vmem:[#allocation3 + $0x8] sm:$0xff] %vm411, %v1328
      %1339 = vst.msk [vmem:[#allocation3 + $0x10] sm:$0xff] %vm411, %v1330
      %1340 = vst.msk [vmem:[#allocation3 + $0x18] sm:$0xff] %vm411, %v1332
      %v1341 = vld [vmem:[#allocation3] sm:$0xff]
      %v1342 = vld [vmem:[#allocation3 + $0x8] sm:$0xff]
      %v1343 = vld [vmem:[#allocation3 + $0x10] sm:$0xff]
      %v1344 = vld [vmem:[#allocation3 + $0x18] sm:$0xff]
      %v1346 = vlaneseq
      %v1347 = vshrl.u32 %v1346, 7
      %v1348 = vsub.s32 0, %v1347
      %v1349 = vrot.slane %v1202, %v1348
      %v1363 = vunpack.c.l.b16 %v1189
      %v1364 = vunpack.c.l.b16 %v1190
      %v1365 = vunpack.c.l.b16 %v1191
      %v1366 = vunpack.c.l.b16 %v1192
      %v1367 = vunpack.c.l.b16 %v1193
      %v1368 = vunpack.c.l.b16 %v1194
      %v1369 = vunpack.c.l.b16 %v1195
      %v1370 = vunpack.c.l.b16 %v1196
      %v1371 = vunpack.c.l.b16 %v1197
      %v1372 = vunpack.c.l.b16 %v1198
      %v1373 = vunpack.c.l.b16 %v1199
      %v1374 = vunpack.c.l.b16 %v1200
      %v1375 = vpack.c.b16 %v1364, %v1363
      %v1376 = vpack.c.b16 %v1366, %v1365
      %v1377 = vpack.c.b16 %v1368, %v1367
      %v1378 = vpack.c.b16 %v1370, %v1369
      %v1379 = vpack.c.b16 %v1372, %v1371
      %v1380 = vpack.c.b16 %v1374, %v1373
      %v1388 = vsel %vm462, %v1341, 0
      %v1391 = vsel %vm462, %v1342, 0
      %v1394 = vsel %vm462, %v1343, 0
      %v1397 = vsel %vm462, %v1344, 0
      %1399 = vmatprep.subr.bf16.mxu0 0
      %1400 = vmatpush1.bf16.msra.mxu0 %v1375
      %1401 = vmatprep.subr.bf16.mxu0 0
      %1402 = vmatpush1.bf16.msra.mxu0 %v1376
      %1403 = vmatprep.subr.bf16.mxu0 0
      %1404 = vmatpush1.bf16.msra.mxu0 %v1377
      %1405 = vmatprep.subr.bf16.mxu0 0
      %1406 = vmatpush1.bf16.msra.mxu0 %v1378
      %1407 = vmatprep.subr.bf16.mxu0 0
      %1408 = vmatpush1.bf16.msra.mxu0 %v1379
      %1409 = vmatprep.subr.bf16.mxu0 0
      %1410 = vmatpush1.bf16.msra.mxu0 %v1380
      %1411 = vmatprep.subr.bf16.mxu0 0
      %1412 = vmatpush1.bf16.msra.mxu0 0
      %1413 = vmatprep.subr.bf16.mxu0 0
      %1414 = vmatpush1.bf16.msra.mxu0 0
      %1415 = vmatprep.subr.bf16.mxu0 0
      %1416 = vmatpush1.bf16.msra.mxu0 0
      %1417 = vmatprep.subr.bf16.mxu0 0
      %1418 = vmatpush1.bf16.msra.mxu0 0
      %1419 = vmatprep.subr.bf16.mxu0 0
      %1420 = vmatpush1.bf16.msra.mxu0 0
      %1421 = vmatprep.subr.bf16.mxu0 0
      %1422 = vmatpush1.bf16.msra.mxu0 0
      %1423 = vmatprep.subr.bf16.mxu0 0
      %1424 = vmatpush1.bf16.msra.mxu0 0
      %1425 = vmatprep.subr.bf16.mxu0 0
      %1426 = vmatpush1.bf16.msra.mxu0 0
      %1427 = vmatprep.subr.bf16.mxu0 0
      %1428 = vmatpush1.bf16.msra.mxu0 0
      %1429 = vmatprep.subr.bf16.mxu0 0
      %1430 = vmatpush1.bf16.msra.mxu0 0
      %1431 = vmatprep.mubr.bf16.mxu0 0
      %1432 = vmatmul.mubr.bf16.gmra.mrb[0].mxu0 %v1388
      %v1433 = vpop.f32.mrb[0].mxu0
      %v1434 = vadd.f32 %v1349, %v1433
      %v1435 = vpop.f32.mrb[0].mxu0
      %v1436 = vpop.f32.mrb[0].mxu0
      %v1437 = vadd.f32 %v1349, %v1436
      %v1438 = vpop.f32.mrb[0].mxu0
      %1439 = vmatprep.mubr.bf16.mxu0 0
      %1440 = vmatmul.mubr.bf16.gmra.mrb[0].mxu0 %v1391
      %v1441 = vpop.f32.mrb[0].mxu0
      %v1442 = vadd.f32 %v1349, %v1441
      %v1443 = vpop.f32.mrb[0].mxu0
      %v1444 = vpop.f32.mrb[0].mxu0
      %v1445 = vadd.f32 %v1349, %v1444
      %v1446 = vpop.f32.mrb[0].mxu0
      %1447 = vmatprep.mubr.bf16.mxu0 0
      %1448 = vmatmul.mubr.bf16.gmra.mrb[0].mxu0 %v1394
      %v1449 = vpop.f32.mrb[0].mxu0
      %v1450 = vadd.f32 %v1349, %v1449
      %v1451 = vpop.f32.mrb[0].mxu0
      %v1452 = vpop.f32.mrb[0].mxu0
      %v1453 = vadd.f32 %v1349, %v1452
      %v1454 = vpop.f32.mrb[0].mxu0
      %1455 = vmatprep.mubr.bf16.mxu0 0
      %1456 = vmatmul.mubr.bf16.gmra.mrb[0].mxu0 %v1397
      %v1457 = vpop.f32.mrb[0].mxu0
      %v1458 = vadd.f32 %v1349, %v1457
      %v1459 = vpop.f32.mrb[0].mxu0
      %v1460 = vpop.f32.mrb[0].mxu0
      %v1461 = vadd.f32 %v1349, %v1460
      %v1462 = vpop.f32.mrb[0].mxu0
      %1463 = vdwg.mxu0
      %v1464 = vadd.f32 %v1434, %v838
      %v1465 = vadd.f32 %v1437, %v839
      %v1466 = vadd.f32 %v1442, %v840
      %v1467 = vadd.f32 %v1445, %v841
      %v1468 = vadd.f32 %v1450, %v842
      %v1469 = vadd.f32 %v1453, %v843
      %v1470 = vadd.f32 %v1458, %v844
      %v1471 = vadd.f32 %v1461, %v845
      %1472 = vst.msk [vmem:[%s224] sm:$0xff] %vm226, %v1464
      %1473 = vst.msk [vmem:[%s224 + $0x8] sm:$0xff] %vm226, %v1465
      %1474 = vst.msk [vmem:[%s224 + $0x10] sm:$0xff] %vm226, %v1466
      %1475 = vst.msk [vmem:[%s224 + $0x18] sm:$0xff] %vm226, %v1467
      %1476 = vst.msk [vmem:[%s224 + $0x20] sm:$0xff] %vm226, %v1468
      %1477 = vst.msk [vmem:[%s224 + $0x28] sm:$0xff] %vm226, %v1469
      %1478 = vst.msk [vmem:[%s224 + $0x30] sm:$0xff] %vm226, %v1470
      %1479 = vst.msk [vmem:[%s224 + $0x38] sm:$0xff] %vm226, %v1471
      %p1480 = scmp.lt.s32.totalorder %s16, 1
      %s1481 = scalar_select %p1480, %s16, 1
      %s1482 = smul.addr %s1481, 8
      %s1483 = smul.addr %s1482, 8
      %s1484 = scalar_lea.vmem %s5, %s1483
      // Predicated region
      $region41: #{tpu_custom_call.1} parent=39 // pred_check
        %p1485 = pneg %p144
      $region42: #{tpu_custom_call.1} parent=39 // pred_check_branch
        %1487 = sbr.rel (%p1485) target = $region44
      $region43: #{tpu_custom_call.1} parent=39 // pred_region
        _
      $region44: #{tpu_custom_call.1} parent=39 // pred_fallthru
        _
    $region40: #{tpu_custom_call.1} parent=5 // pred_fallthru
      _
    %p1488 = scmp.le.s32.totalorder 2, %s11
    // Predicated region
    $region45: #{tpu_custom_call.1} parent=5 // pred_check
      %p1489 = pneg %p1488
    $region46: #{tpu_custom_call.1} parent=5 // pred_check_branch
      %1491 = sbr.rel (%p1489) target = $region48
    $region47: #{tpu_custom_call.1} parent=5 // pred_region
      %s1492 = ssub.s32 %s11, 2
      // Predicated region
      $region49: #{tpu_custom_call.1} parent=47 // pred_check
        %p1493 = pneg %p150
      $region50: #{tpu_custom_call.1} parent=47 // pred_check_branch
        %1495 = sbr.rel (%p1493) target = $region52
      $region51: #{tpu_custom_call.1} parent=47 // pred_region
        %p1496 = scmp.lt.s32.totalorder %s17, 1
        %s1497 = scalar_select %p1496, %s17, 1
        %s1498 = smul.addr %s1497, 8
        %s1499 = smul.addr %s1498, 8
        %s1500 = scalar_lea.vmem %s5, %s1499
      $region52: #{tpu_custom_call.1} parent=47 // pred_fallthru
        _
    $region48: #{tpu_custom_call.1} parent=5 // pred_fallthru
      _
  $region6: #{tpu_custom_call.1} parent=0 // loop_footer
    %s15 = sadd.s32 1, %s11
  $region7: #{tpu_custom_call.1} parent=0 // loop_footer_branch
    %10 = sbr.rel target = $region3
  $region8: #{tpu_custom_call.1} parent=0 // loop_exit
    _

</llo_original>
